<compile_context>
chip_gen: v7x
topology: tpu7x:2x2x1
jax: 0.10.0
libtpu: 0.0.40
codegen_flags: <defaults>
</compile_context>

<pallas_src>
import functools

import jax
import jax.numpy as jnp
from jax.experimental import pallas as pl
from jax.experimental.pallas import tpu as pltpu


def _sigmoid(x):
    # sigmoid(x) == 0.5 * tanh(0.5 * x) + 0.5 : a single EUP tanh push plus a
    # VPU fma, instead of exp + reciprocal/divide (perf review: shortens the
    # per-step transcendental chain on the serial recurrence).
    return 0.5 * jnp.tanh(0.5 * x) + 0.5


def lstm_classifier_kernel(x_ref, wih_ref, whh_ref, b_ref, wl_ref, bl_ref,
                           out_ref, xg_sc, *, seq_len, batch, hidden):
    """Single-invocation kernel.

    x_ref   : (S*B, I_pad)  bf16  timestep-major flattened, lane-padded input
    wih_ref : (I_pad, 4H)   bf16  W_ih^T (zero-padded rows)
    whh_ref : (H, 4H)       bf16  W_hh^T
    b_ref   : (1, 4H)       f32   b_ih + b_hh
    wl_ref  : (H, Cpad)     bf16  W_lin^T (lane-padded)
    bl_ref  : (1, Cpad)     f32   b_lin   (lane-padded)
    out_ref : (B, Cpad)     f32
    xg_sc   : (S*B, 4H)     f32   scratch for the hoisted input projection
    """
    B, H = batch, hidden

    # ---- Hoisted input projection: one big MXU matmul for all timesteps with
    # the combined bias folded in once; off the recurrent critical path.
    # NOTE(v7x): at these sizes this scratch is ~128 KiB; for long sequences
    # store it bf16 and/or time-chunk it (emit_pipeline / grid axis) with a
    # raised vmem_limit_bytes so it stays inside v7x's 64 MiB VMEM.
    xg_sc[...] = (
        jnp.dot(x_ref[...], wih_ref[...], preferred_element_type=jnp.float32)
        + b_ref[...])

    h0 = jnp.zeros((B, H), jnp.float32)
    c0 = jnp.zeros((B, H), jnp.float32)

    def step(t, carry):
        h, c = carry                           # vreg carries, no VMEM per step
        row = pl.multiple_of(t * B, B)         # sublane-aligned slice start
        x_gates = xg_sc[pl.ds(row, B), :]      # (B, 4H) precomputed, f32

        # h @ W_hh^T is the only matmul left on the serial chain.
        # (bf16 re-rounding of h each step is fine at S=8 / 2e-2 tolerance;
        # keep the recurrent matmul f32 if long-sequence accuracy matters.)
        gates = x_gates + jnp.dot(h.astype(whh_ref.dtype), whh_ref[...],
                                  preferred_element_type=jnp.float32)

        # PyTorch gate order: i, f, g, o.  All gate/state math stays f32
        # (v5e VPU/EUP have no bf16 path).
        i_g = _sigmoid(gates[:, 0 * H:1 * H])
        f_g = _sigmoid(gates[:, 1 * H:2 * H])
        g_g = jnp.tanh(gates[:, 2 * H:3 * H])
        o_g = _sigmoid(gates[:, 3 * H:4 * H])
        c_new = f_g * c + i_g * g_g
        h_new = o_g * jnp.tanh(c_new)
        # Padded batch rows (B_real..B) carry garbage h/c; harmless, they are
        # sliced off in the wrapper and never reduced over in-kernel.
        return h_new, c_new

    # Full unroll for short sequences (LLO scheduling visibility); capped
    # partial unroll for long ones to avoid instruction-memory / regalloc
    # spills.
    unroll = seq_len if seq_len <= 16 else 8
    h_T, _ = jax.lax.fori_loop(0, seq_len, step, (h0, c0), unroll=unroll)

    # ---- Linear head on the final hidden state; lane-dense (Cpad=128) store.
    out_ref[...] = (
        jnp.dot(h_T.astype(wl_ref.dtype), wl_ref[...],
                preferred_element_type=jnp.float32)
        + bl_ref[...]).astype(out_ref.dtype)


def lstm_classifier_forward(x, w_ih, w_hh, b, w_lin, b_lin):
    """x: (S, B, I) f32. Weights pre-transposed for right-multiplication:
    w_ih (I,4H), w_hh (H,4H), b (1,4H)=b_ih+b_hh, w_lin (H,C), b_lin (1,C)."""
    S, B, I = x.shape
    H = w_hh.shape[0]
    C = w_lin.shape[1]

    SUBLANE, LANE = 8, 128
    # f32 gate/state math -> pad tiny batches to 8 sublanes; once real batches
    # arrive, pad to the bf16 sublane count (16) so the bf16 recurrent-matmul
    # LHS packs densely (perf review).
    B_pad = SUBLANE if B <= SUBLANE else pl.cdiv(B, 16) * 16
    C_pad = max(LANE, pl.cdiv(C, LANE) * LANE)   # lane-dense classifier output
    I_pad = max(LANE, pl.cdiv(I, LANE) * LANE)   # lane-dense input features

    # Cast first (one pass over the small unpadded f32 array), then a single
    # jnp.pad over batch+feature dims; the row-major reshape is free.
    # TODO(synk): for long sequences pass x unpadded and pad/cast inside a
    # time-chunked kernel to avoid extra HBM round trips in the wrapper.
    x_bf = x.astype(jnp.bfloat16)
    x_p = jnp.pad(x_bf, ((0, 0), (0, B_pad - B), (0, I_pad - I)))
    x2d = x_p.reshape(S * B_pad, I_pad)

    wih = jnp.pad(w_ih, ((0, I_pad - I), (0, 0))).astype(jnp.bfloat16)
    whh = w_hh.astype(jnp.bfloat16)
    wl = jnp.pad(w_lin, ((0, 0), (0, C_pad - C))).astype(jnp.bfloat16)
    bl = jnp.pad(b_lin, ((0, 0), (0, C_pad - C))).astype(jnp.float32)
    bias = b.astype(jnp.float32)

    kernel = functools.partial(lstm_classifier_kernel,
                               seq_len=S, batch=B_pad, hidden=H)

    out_padded = pl.pallas_call(
        kernel,
        out_shape=jax.ShapeDtypeStruct((B_pad, C_pad), jnp.float32),
        in_specs=[pl.BlockSpec(memory_space=pltpu.MemorySpace.VMEM)] * 6,
        out_specs=pl.BlockSpec(memory_space=pltpu.MemorySpace.VMEM),
        scratch_shapes=[pltpu.VMEM((S * B_pad, 4 * H), jnp.float32)],
    )(x2d, wih, whh, bias, wl, bl)

    return out_padded[:B, :C]


def reference_forward(x, w_ih, w_hh, b, w_lin, b_lin):
    """Plain-JAX f32 reference matching PyTorch nn.LSTM + nn.Linear semantics."""
    S, B, I = x.shape
    H = w_hh.shape[0]
    h = jnp.zeros((B, H), jnp.float32)
    c = jnp.zeros((B, H), jnp.float32)
    for t in range(S):
        gates = x[t] @ w_ih + h @ w_hh + b
        i = jax.nn.sigmoid(gates[:, 0 * H:1 * H])
        f = jax.nn.sigmoid(gates[:, 1 * H:2 * H])
        g = jnp.tanh(gates[:, 2 * H:3 * H])
        o = jax.nn.sigmoid(gates[:, 3 * H:4 * H])
        c = f * c + i * g
        h = o * jnp.tanh(c)
    return h @ w_lin + b_lin


if __name__ == "__main__":
    # Module hyperparameters (defaults of LSTM_Classifier)
    classes, input_size, hidden_size = 10, 28, 128
    seq_len, batch = 8, 2

    key = jax.random.PRNGKey(0)
    ks = jax.random.split(key, 7)
    scale = 1.0 / jnp.sqrt(hidden_size)

    # Deterministic synthetic parameters (PyTorch shapes, stored pre-transposed
    # for right-multiplication on the MXU).
    w_ih = jax.random.uniform(ks[0], (input_size, 4 * hidden_size),
                              jnp.float32, -scale, scale)      # = W_ih^T
    w_hh = jax.random.uniform(ks[1], (hidden_size, 4 * hidden_size),
                              jnp.float32, -scale, scale)      # = W_hh^T
    b_ih = jax.random.uniform(ks[2], (1, 4 * hidden_size),
                              jnp.float32, -scale, scale)
    b_hh = jax.random.uniform(ks[3], (1, 4 * hidden_size),
                              jnp.float32, -scale, scale)
    b = b_ih + b_hh
    w_lin = jax.random.uniform(ks[4], (hidden_size, classes),
                               jnp.float32, -scale, scale)     # = W_lin^T
    b_lin = jax.random.uniform(ks[5], (1, classes),
                               jnp.float32, -scale, scale)

    x = jax.random.normal(ks[6], (seq_len, batch, input_size), jnp.float32)

    out = lstm_classifier_forward(x, w_ih, w_hh, b, w_lin, b_lin)
    out = jax.block_until_ready(out)

    ref = reference_forward(x, w_ih, w_hh, b, w_lin, b_lin)
    assert out.shape == (batch, classes)
    # bf16 MXU operands with f32 accumulation -> loosened tolerance vs the
    # pure-f32 reference.
    err = float(jnp.max(jnp.abs(out - ref)))
    assert jnp.allclose(out, ref, atol=2e-2, rtol=2e-2), f"max abs err={err}"

    print("KERNEL_OK")
</pallas_src>

<mosaic_0001>
module attributes {stable_mosaic.version = 11 : i64} {
  func.func @lstm_classifier_kernel(%arg0: memref<64x128xbf16, #tpu.memory_space<vmem>>, %arg1: memref<128x512xbf16, #tpu.memory_space<vmem>>, %arg2: memref<128x512xbf16, #tpu.memory_space<vmem>>, %arg3: memref<1x512xf32, #tpu.memory_space<vmem>>, %arg4: memref<128x128xbf16, #tpu.memory_space<vmem>>, %arg5: memref<1x128xf32, #tpu.memory_space<vmem>>, %arg6: memref<8x128xf32, #tpu.memory_space<vmem>>, %arg7: memref<64x512xf32, #tpu.memory_space<vmem>>) attributes {dimension_semantics = [], scalar_prefetch = 0 : i64, scratch_operands = 1 : i64, tpu.core_type = #tpu.core_type<tc>} {
    %c0 = arith.constant 0 : index
    %c0_0 = arith.constant 0 : index
    %0 = vector.load %arg0[%c0, %c0_0] : memref<64x128xbf16, #tpu.memory_space<vmem>>, vector<64x128xbf16>
    %c0_1 = arith.constant 0 : index
    %c0_2 = arith.constant 0 : index
    %1 = vector.load %arg1[%c0_1, %c0_2] : memref<128x512xbf16, #tpu.memory_space<vmem>>, vector<128x512xbf16>
    %cst = arith.constant dense<0.000000e+00> : vector<64x512xf32>
    %2 = tpu.matmul %0, %1, %cst {dimension_numbers = #tpu.dot_dimension_numbers<[1], [0], [0], [1], [0, 0, 1, 1], [], []>} : vector<64x128xbf16>, vector<128x512xbf16>, vector<64x512xf32> -> vector<64x512xf32>
    %c0_3 = arith.constant 0 : index
    %c0_4 = arith.constant 0 : index
    %3 = vector.load %arg3[%c0_3, %c0_4] : memref<1x512xf32, #tpu.memory_space<vmem>>, vector<1x512xf32>
    %4 = vector.broadcast %3 : vector<1x512xf32> to vector<64x512xf32>
    %5 = arith.addf %2, %4 : vector<64x512xf32>
    %c0_5 = arith.constant 0 : index
    %c0_6 = arith.constant 0 : index
    %6 = vector.load %arg7[%c0_5, %c0_6] : memref<64x512xf32, #tpu.memory_space<vmem>>, vector<64x512xf32>
    tpu.vector_store %arg7[%c0_5, %c0_6], %5 {strides = array<i32>} : memref<64x512xf32, #tpu.memory_space<vmem>>, vector<64x512xf32>,
    %cst_7 = arith.constant 0.000000e+00 : f32
    %7 = vector.broadcast %cst_7 : f32 to vector<8x128xf32>
    %cst_8 = arith.constant 0.000000e+00 : f32
    %8 = vector.broadcast %cst_8 : f32 to vector<8x128xf32>
    %c0_i32 = arith.constant 0 : i32
    %c8_i32 = arith.constant 8 : i32
    %9 = arith.muli %c0_i32, %c8_i32 : i32
    %10 = tpu.assume_multiple %9, 8 : i32
    %11 = arith.index_cast %10 : i32 to index
    %c0_9 = arith.constant 0 : index
    %12 = vector.load %arg7[%11, %c0_9] : memref<64x512xf32, #tpu.memory_space<vmem>>, vector<8x512xf32>
    %13 = arith.truncf %7 : vector<8x128xf32> to vector<8x128xbf16>
    %c0_10 = arith.constant 0 : index
    %c0_11 = arith.constant 0 : index
    %14 = vector.load %arg2[%c0_10, %c0_11] : memref<128x512xbf16, #tpu.memory_space<vmem>>, vector<128x512xbf16>
    %cst_12 = arith.constant dense<0.000000e+00> : vector<8x512xf32>
    %15 = tpu.matmul %13, %14, %cst_12 {dimension_numbers = #tpu.dot_dimension_numbers<[1], [0], [0], [1], [0, 0, 1, 1], [], []>} : vector<8x128xbf16>, vector<128x512xbf16>, vector<8x512xf32> -> vector<8x512xf32>
    %16 = arith.addf %12, %15 : vector<8x512xf32>
    %17 = vector.extract_strided_slice %16 {offsets = [0, 0], sizes = [8, 128], strides = [1, 1]} : vector<8x512xf32> to vector<8x128xf32>
    %cst_13 = arith.constant 5.000000e-01 : f32
    %18 = vector.broadcast %cst_13 : f32 to vector<8x128xf32>
    %19 = arith.mulf %18, %17 : vector<8x128xf32>
    %20 = math.tanh %19 : vector<8x128xf32>
    %cst_14 = arith.constant 5.000000e-01 : f32
    %21 = vector.broadcast %cst_14 : f32 to vector<8x128xf32>
    %22 = arith.mulf %21, %20 : vector<8x128xf32>
    %cst_15 = arith.constant 5.000000e-01 : f32
    %23 = vector.broadcast %cst_15 : f32 to vector<8x128xf32>
    %24 = arith.addf %22, %23 : vector<8x128xf32>
    %25 = vector.extract_strided_slice %16 {offsets = [0, 128], sizes = [8, 128], strides = [1, 1]} : vector<8x512xf32> to vector<8x128xf32>
    %cst_16 = arith.constant 5.000000e-01 : f32
    %26 = vector.broadcast %cst_16 : f32 to vector<8x128xf32>
    %27 = arith.mulf %26, %25 : vector<8x128xf32>
    %28 = math.tanh %27 : vector<8x128xf32>
    %cst_17 = arith.constant 5.000000e-01 : f32
    %29 = vector.broadcast %cst_17 : f32 to vector<8x128xf32>
    %30 = arith.mulf %29, %28 : vector<8x128xf32>
    %cst_18 = arith.constant 5.000000e-01 : f32
    %31 = vector.broadcast %cst_18 : f32 to vector<8x128xf32>
    %32 = arith.addf %30, %31 : vector<8x128xf32>
    %33 = vector.extract_strided_slice %16 {offsets = [0, 256], sizes = [8, 128], strides = [1, 1]} : vector<8x512xf32> to vector<8x128xf32>
    %34 = math.tanh %33 : vector<8x128xf32>
    %35 = vector.extract_strided_slice %16 {offsets = [0, 384], sizes = [8, 128], strides = [1, 1]} : vector<8x512xf32> to vector<8x128xf32>
    %cst_19 = arith.constant 5.000000e-01 : f32
    %36 = vector.broadcast %cst_19 : f32 to vector<8x128xf32>
    %37 = arith.mulf %36, %35 : vector<8x128xf32>
    %38 = math.tanh %37 : vector<8x128xf32>
    %cst_20 = arith.constant 5.000000e-01 : f32
    %39 = vector.broadcast %cst_20 : f32 to vector<8x128xf32>
    %40 = arith.mulf %39, %38 : vector<8x128xf32>
    %cst_21 = arith.constant 5.000000e-01 : f32
    %41 = vector.broadcast %cst_21 : f32 to vector<8x128xf32>
    %42 = arith.addf %40, %41 : vector<8x128xf32>
    %43 = arith.mulf %32, %8 : vector<8x128xf32>
    %44 = arith.mulf %24, %34 : vector<8x128xf32>
    %45 = arith.addf %43, %44 : vector<8x128xf32>
    %46 = math.tanh %45 : vector<8x128xf32>
    %47 = arith.mulf %42, %46 : vector<8x128xf32>
    %c1_i32 = arith.constant 1 : i32
    %c8_i32_22 = arith.constant 8 : i32
    %48 = arith.muli %c1_i32, %c8_i32_22 : i32
    %49 = tpu.assume_multiple %48, 8 : i32
    %50 = arith.index_cast %49 : i32 to index
    %c0_23 = arith.constant 0 : index
    %51 = vector.load %arg7[%50, %c0_23] : memref<64x512xf32, #tpu.memory_space<vmem>>, vector<8x512xf32>
    %52 = arith.truncf %47 : vector<8x128xf32> to vector<8x128xbf16>
    %c0_24 = arith.constant 0 : index
    %c0_25 = arith.constant 0 : index
    %53 = vector.load %arg2[%c0_24, %c0_25] : memref<128x512xbf16, #tpu.memory_space<vmem>>, vector<128x512xbf16>
    %cst_26 = arith.constant dense<0.000000e+00> : vector<8x512xf32>
    %54 = tpu.matmul %52, %53, %cst_26 {dimension_numbers = #tpu.dot_dimension_numbers<[1], [0], [0], [1], [0, 0, 1, 1], [], []>} : vector<8x128xbf16>, vector<128x512xbf16>, vector<8x512xf32> -> vector<8x512xf32>
    %55 = arith.addf %51, %54 : vector<8x512xf32>
    %56 = vector.extract_strided_slice %55 {offsets = [0, 0], sizes = [8, 128], strides = [1, 1]} : vector<8x512xf32> to vector<8x128xf32>
    %cst_27 = arith.constant 5.000000e-01 : f32
    %57 = vector.broadcast %cst_27 : f32 to vector<8x128xf32>
    %58 = arith.mulf %57, %56 : vector<8x128xf32>
    %59 = math.tanh %58 : vector<8x128xf32>
    %cst_28 = arith.constant 5.000000e-01 : f32
    %60 = vector.broadcast %cst_28 : f32 to vector<8x128xf32>
    %61 = arith.mulf %60, %59 : vector<8x128xf32>
    %cst_29 = arith.constant 5.000000e-01 : f32
    %62 = vector.broadcast %cst_29 : f32 to vector<8x128xf32>
    %63 = arith.addf %61, %62 : vector<8x128xf32>
    %64 = vector.extract_strided_slice %55 {offsets = [0, 128], sizes = [8, 128], strides = [1, 1]} : vector<8x512xf32> to vector<8x128xf32>
    %cst_30 = arith.constant 5.000000e-01 : f32
    %65 = vector.broadcast %cst_30 : f32 to vector<8x128xf32>
    %66 = arith.mulf %65, %64 : vector<8x128xf32>
    %67 = math.tanh %66 : vector<8x128xf32>
    %cst_31 = arith.constant 5.000000e-01 : f32
    %68 = vector.broadcast %cst_31 : f32 to vector<8x128xf32>
    %69 = arith.mulf %68, %67 : vector<8x128xf32>
    %cst_32 = arith.constant 5.000000e-01 : f32
    %70 = vector.broadcast %cst_32 : f32 to vector<8x128xf32>
    %71 = arith.addf %69, %70 : vector<8x128xf32>
    %72 = vector.extract_strided_slice %55 {offsets = [0, 256], sizes = [8, 128], strides = [1, 1]} : vector<8x512xf32> to vector<8x128xf32>
    %73 = math.tanh %72 : vector<8x128xf32>
    %74 = vector.extract_strided_slice %55 {offsets = [0, 384], sizes = [8, 128], strides = [1, 1]} : vector<8x512xf32> to vector<8x128xf32>
    %cst_33 = arith.constant 5.000000e-01 : f32
    %75 = vector.broadcast %cst_33 : f32 to vector<8x128xf32>
    %76 = arith.mulf %75, %74 : vector<8x128xf32>
    %77 = math.tanh %76 : vector<8x128xf32>
    %cst_34 = arith.constant 5.000000e-01 : f32
    %78 = vector.broadcast %cst_34 : f32 to vector<8x128xf32>
    %79 = arith.mulf %78, %77 : vector<8x128xf32>
    %cst_35 = arith.constant 5.000000e-01 : f32
    %80 = vector.broadcast %cst_35 : f32 to vector<8x128xf32>
    %81 = arith.addf %79, %80 : vector<8x128xf32>
    %82 = arith.mulf %71, %45 : vector<8x128xf32>
    %83 = arith.mulf %63, %73 : vector<8x128xf32>
    %84 = arith.addf %82, %83 : vector<8x128xf32>
    %85 = math.tanh %84 : vector<8x128xf32>
    %86 = arith.mulf %81, %85 : vector<8x128xf32>
    %c2_i32 = arith.constant 2 : i32
    %c8_i32_36 = arith.constant 8 : i32
    %87 = arith.muli %c2_i32, %c8_i32_36 : i32
    %88 = tpu.assume_multiple %87, 8 : i32
    %89 = arith.index_cast %88 : i32 to index
    %c0_37 = arith.constant 0 : index
    %90 = vector.load %arg7[%89, %c0_37] : memref<64x512xf32, #tpu.memory_space<vmem>>, vector<8x512xf32>
    %91 = arith.truncf %86 : vector<8x128xf32> to vector<8x128xbf16>
    %c0_38 = arith.constant 0 : index
    %c0_39 = arith.constant 0 : index
    %92 = vector.load %arg2[%c0_38, %c0_39] : memref<128x512xbf16, #tpu.memory_space<vmem>>, vector<128x512xbf16>
    %cst_40 = arith.constant dense<0.000000e+00> : vector<8x512xf32>
    %93 = tpu.matmul %91, %92, %cst_40 {dimension_numbers = #tpu.dot_dimension_numbers<[1], [0], [0], [1], [0, 0, 1, 1], [], []>} : vector<8x128xbf16>, vector<128x512xbf16>, vector<8x512xf32> -> vector<8x512xf32>
    %94 = arith.addf %90, %93 : vector<8x512xf32>
    %95 = vector.extract_strided_slice %94 {offsets = [0, 0], sizes = [8, 128], strides = [1, 1]} : vector<8x512xf32> to vector<8x128xf32>
    %cst_41 = arith.constant 5.000000e-01 : f32
    %96 = vector.broadcast %cst_41 : f32 to vector<8x128xf32>
    %97 = arith.mulf %96, %95 : vector<8x128xf32>
    %98 = math.tanh %97 : vector<8x128xf32>
    %cst_42 = arith.constant 5.000000e-01 : f32
    %99 = vector.broadcast %cst_42 : f32 to vector<8x128xf32>
    %100 = arith.mulf %99, %98 : vector<8x128xf32>
    %cst_43 = arith.constant 5.000000e-01 : f32
    %101 = vector.broadcast %cst_43 : f32 to vector<8x128xf32>
    %102 = arith.addf %100, %101 : vector<8x128xf32>
    %103 = vector.extract_strided_slice %94 {offsets = [0, 128], sizes = [8, 128], strides = [1, 1]} : vector<8x512xf32> to vector<8x128xf32>
    %cst_44 = arith.constant 5.000000e-01 : f32
    %104 = vector.broadcast %cst_44 : f32 to vector<8x128xf32>
    %105 = arith.mulf %104, %103 : vector<8x128xf32>
    %106 = math.tanh %105 : vector<8x128xf32>
    %cst_45 = arith.constant 5.000000e-01 : f32
    %107 = vector.broadcast %cst_45 : f32 to vector<8x128xf32>
    %108 = arith.mulf %107, %106 : vector<8x128xf32>
    %cst_46 = arith.constant 5.000000e-01 : f32
    %109 = vector.broadcast %cst_46 : f32 to vector<8x128xf32>
    %110 = arith.addf %108, %109 : vector<8x128xf32>
    %111 = vector.extract_strided_slice %94 {offsets = [0, 256], sizes = [8, 128], strides = [1, 1]} : vector<8x512xf32> to vector<8x128xf32>
    %112 = math.tanh %111 : vector<8x128xf32>
    %113 = vector.extract_strided_slice %94 {offsets = [0, 384], sizes = [8, 128], strides = [1, 1]} : vector<8x512xf32> to vector<8x128xf32>
    %cst_47 = arith.constant 5.000000e-01 : f32
    %114 = vector.broadcast %cst_47 : f32 to vector<8x128xf32>
    %115 = arith.mulf %114, %113 : vector<8x128xf32>
    %116 = math.tanh %115 : vector<8x128xf32>
    %cst_48 = arith.constant 5.000000e-01 : f32
    %117 = vector.broadcast %cst_48 : f32 to vector<8x128xf32>
    %118 = arith.mulf %117, %116 : vector<8x128xf32>
    %cst_49 = arith.constant 5.000000e-01 : f32
    %119 = vector.broadcast %cst_49 : f32 to vector<8x128xf32>
    %120 = arith.addf %118, %119 : vector<8x128xf32>
    %121 = arith.mulf %110, %84 : vector<8x128xf32>
    %122 = arith.mulf %102, %112 : vector<8x128xf32>
    %123 = arith.addf %121, %122 : vector<8x128xf32>
    %124 = math.tanh %123 : vector<8x128xf32>
    %125 = arith.mulf %120, %124 : vector<8x128xf32>
    %c3_i32 = arith.constant 3 : i32
    %c8_i32_50 = arith.constant 8 : i32
    %126 = arith.muli %c3_i32, %c8_i32_50 : i32
    %127 = tpu.assume_multiple %126, 8 : i32
    %128 = arith.index_cast %127 : i32 to index
    %c0_51 = arith.constant 0 : index
    %129 = vector.load %arg7[%128, %c0_51] : memref<64x512xf32, #tpu.memory_space<vmem>>, vector<8x512xf32>
    %130 = arith.truncf %125 : vector<8x128xf32> to vector<8x128xbf16>
    %c0_52 = arith.constant 0 : index
    %c0_53 = arith.constant 0 : index
    %131 = vector.load %arg2[%c0_52, %c0_53] : memref<128x512xbf16, #tpu.memory_space<vmem>>, vector<128x512xbf16>
    %cst_54 = arith.constant dense<0.000000e+00> : vector<8x512xf32>
    %132 = tpu.matmul %130, %131, %cst_54 {dimension_numbers = #tpu.dot_dimension_numbers<[1], [0], [0], [1], [0, 0, 1, 1], [], []>} : vector<8x128xbf16>, vector<128x512xbf16>, vector<8x512xf32> -> vector<8x512xf32>
    %133 = arith.addf %129, %132 : vector<8x512xf32>
    %134 = vector.extract_strided_slice %133 {offsets = [0, 0], sizes = [8, 128], strides = [1, 1]} : vector<8x512xf32> to vector<8x128xf32>
    %cst_55 = arith.constant 5.000000e-01 : f32
    %135 = vector.broadcast %cst_55 : f32 to vector<8x128xf32>
    %136 = arith.mulf %135, %134 : vector<8x128xf32>
    %137 = math.tanh %136 : vector<8x128xf32>
    %cst_56 = arith.constant 5.000000e-01 : f32
    %138 = vector.broadcast %cst_56 : f32 to vector<8x128xf32>
    %139 = arith.mulf %138, %137 : vector<8x128xf32>
    %cst_57 = arith.constant 5.000000e-01 : f32
    %140 = vector.broadcast %cst_57 : f32 to vector<8x128xf32>
    %141 = arith.addf %139, %140 : vector<8x128xf32>
    %142 = vector.extract_strided_slice %133 {offsets = [0, 128], sizes = [8, 128], strides = [1, 1]} : vector<8x512xf32> to vector<8x128xf32>
    %cst_58 = arith.constant 5.000000e-01 : f32
    %143 = vector.broadcast %cst_58 : f32 to vector<8x128xf32>
    %144 = arith.mulf %143, %142 : vector<8x128xf32>
    %145 = math.tanh %144 : vector<8x128xf32>
    %cst_59 = arith.constant 5.000000e-01 : f32
    %146 = vector.broadcast %cst_59 : f32 to vector<8x128xf32>
    %147 = arith.mulf %146, %145 : vector<8x128xf32>
    %cst_60 = arith.constant 5.000000e-01 : f32
    %148 = vector.broadcast %cst_60 : f32 to vector<8x128xf32>
    %149 = arith.addf %147, %148 : vector<8x128xf32>
    %150 = vector.extract_strided_slice %133 {offsets = [0, 256], sizes = [8, 128], strides = [1, 1]} : vector<8x512xf32> to vector<8x128xf32>
    %151 = math.tanh %150 : vector<8x128xf32>
    %152 = vector.extract_strided_slice %133 {offsets = [0, 384], sizes = [8, 128], strides = [1, 1]} : vector<8x512xf32> to vector<8x128xf32>
    %cst_61 = arith.constant 5.000000e-01 : f32
    %153 = vector.broadcast %cst_61 : f32 to vector<8x128xf32>
    %154 = arith.mulf %153, %152 : vector<8x128xf32>
    %155 = math.tanh %154 : vector<8x128xf32>
    %cst_62 = arith.constant 5.000000e-01 : f32
    %156 = vector.broadcast %cst_62 : f32 to vector<8x128xf32>
    %157 = arith.mulf %156, %155 : vector<8x128xf32>
    %cst_63 = arith.constant 5.000000e-01 : f32
    %158 = vector.broadcast %cst_63 : f32 to vector<8x128xf32>
    %159 = arith.addf %157, %158 : vector<8x128xf32>
    %160 = arith.mulf %149, %123 : vector<8x128xf32>
    %161 = arith.mulf %141, %151 : vector<8x128xf32>
    %162 = arith.addf %160, %161 : vector<8x128xf32>
    %163 = math.tanh %162 : vector<8x128xf32>
    %164 = arith.mulf %159, %163 : vector<8x128xf32>
    %c4_i32 = arith.constant 4 : i32
    %c8_i32_64 = arith.constant 8 : i32
    %165 = arith.muli %c4_i32, %c8_i32_64 : i32
    %166 = tpu.assume_multiple %165, 8 : i32
    %167 = arith.index_cast %166 : i32 to index
    %c0_65 = arith.constant 0 : index
    %168 = vector.load %arg7[%167, %c0_65] : memref<64x512xf32, #tpu.memory_space<vmem>>, vector<8x512xf32>
    %169 = arith.truncf %164 : vector<8x128xf32> to vector<8x128xbf16>
    %c0_66 = arith.constant 0 : index
    %c0_67 = arith.constant 0 : index
    %170 = vector.load %arg2[%c0_66, %c0_67] : memref<128x512xbf16, #tpu.memory_space<vmem>>, vector<128x512xbf16>
    %cst_68 = arith.constant dense<0.000000e+00> : vector<8x512xf32>
    %171 = tpu.matmul %169, %170, %cst_68 {dimension_numbers = #tpu.dot_dimension_numbers<[1], [0], [0], [1], [0, 0, 1, 1], [], []>} : vector<8x128xbf16>, vector<128x512xbf16>, vector<8x512xf32> -> vector<8x512xf32>
    %172 = arith.addf %168, %171 : vector<8x512xf32>
    %173 = vector.extract_strided_slice %172 {offsets = [0, 0], sizes = [8, 128], strides = [1, 1]} : vector<8x512xf32> to vector<8x128xf32>
    %cst_69 = arith.constant 5.000000e-01 : f32
    %174 = vector.broadcast %cst_69 : f32 to vector<8x128xf32>
    %175 = arith.mulf %174, %173 : vector<8x128xf32>
    %176 = math.tanh %175 : vector<8x128xf32>
    %cst_70 = arith.constant 5.000000e-01 : f32
    %177 = vector.broadcast %cst_70 : f32 to vector<8x128xf32>
    %178 = arith.mulf %177, %176 : vector<8x128xf32>
    %cst_71 = arith.constant 5.000000e-01 : f32
    %179 = vector.broadcast %cst_71 : f32 to vector<8x128xf32>
    %180 = arith.addf %178, %179 : vector<8x128xf32>
    %181 = vector.extract_strided_slice %172 {offsets = [0, 128], sizes = [8, 128], strides = [1, 1]} : vector<8x512xf32> to vector<8x128xf32>
    %cst_72 = arith.constant 5.000000e-01 : f32
    %182 = vector.broadcast %cst_72 : f32 to vector<8x128xf32>
    %183 = arith.mulf %182, %181 : vector<8x128xf32>
    %184 = math.tanh %183 : vector<8x128xf32>
    %cst_73 = arith.constant 5.000000e-01 : f32
    %185 = vector.broadcast %cst_73 : f32 to vector<8x128xf32>
    %186 = arith.mulf %185, %184 : vector<8x128xf32>
    %cst_74 = arith.constant 5.000000e-01 : f32
    %187 = vector.broadcast %cst_74 : f32 to vector<8x128xf32>
    %188 = arith.addf %186, %187 : vector<8x128xf32>
    %189 = vector.extract_strided_slice %172 {offsets = [0, 256], sizes = [8, 128], strides = [1, 1]} : vector<8x512xf32> to vector<8x128xf32>
    %190 = math.tanh %189 : vector<8x128xf32>
    %191 = vector.extract_strided_slice %172 {offsets = [0, 384], sizes = [8, 128], strides = [1, 1]} : vector<8x512xf32> to vector<8x128xf32>
    %cst_75 = arith.constant 5.000000e-01 : f32
    %192 = vector.broadcast %cst_75 : f32 to vector<8x128xf32>
    %193 = arith.mulf %192, %191 : vector<8x128xf32>
    %194 = math.tanh %193 : vector<8x128xf32>
    %cst_76 = arith.constant 5.000000e-01 : f32
    %195 = vector.broadcast %cst_76 : f32 to vector<8x128xf32>
    %196 = arith.mulf %195, %194 : vector<8x128xf32>
    %cst_77 = arith.constant 5.000000e-01 : f32
    %197 = vector.broadcast %cst_77 : f32 to vector<8x128xf32>
    %198 = arith.addf %196, %197 : vector<8x128xf32>
    %199 = arith.mulf %188, %162 : vector<8x128xf32>
    %200 = arith.mulf %180, %190 : vector<8x128xf32>
    %201 = arith.addf %199, %200 : vector<8x128xf32>
    %202 = math.tanh %201 : vector<8x128xf32>
    %203 = arith.mulf %198, %202 : vector<8x128xf32>
    %c5_i32 = arith.constant 5 : i32
    %c8_i32_78 = arith.constant 8 : i32
    %204 = arith.muli %c5_i32, %c8_i32_78 : i32
    %205 = tpu.assume_multiple %204, 8 : i32
    %206 = arith.index_cast %205 : i32 to index
    %c0_79 = arith.constant 0 : index
    %207 = vector.load %arg7[%206, %c0_79] : memref<64x512xf32, #tpu.memory_space<vmem>>, vector<8x512xf32>
    %208 = arith.truncf %203 : vector<8x128xf32> to vector<8x128xbf16>
    %c0_80 = arith.constant 0 : index
    %c0_81 = arith.constant 0 : index
    %209 = vector.load %arg2[%c0_80, %c0_81] : memref<128x512xbf16, #tpu.memory_space<vmem>>, vector<128x512xbf16>
    %cst_82 = arith.constant dense<0.000000e+00> : vector<8x512xf32>
    %210 = tpu.matmul %208, %209, %cst_82 {dimension_numbers = #tpu.dot_dimension_numbers<[1], [0], [0], [1], [0, 0, 1, 1], [], []>} : vector<8x128xbf16>, vector<128x512xbf16>, vector<8x512xf32> -> vector<8x512xf32>
    %211 = arith.addf %207, %210 : vector<8x512xf32>
    %212 = vector.extract_strided_slice %211 {offsets = [0, 0], sizes = [8, 128], strides = [1, 1]} : vector<8x512xf32> to vector<8x128xf32>
    %cst_83 = arith.constant 5.000000e-01 : f32
    %213 = vector.broadcast %cst_83 : f32 to vector<8x128xf32>
    %214 = arith.mulf %213, %212 : vector<8x128xf32>
    %215 = math.tanh %214 : vector<8x128xf32>
    %cst_84 = arith.constant 5.000000e-01 : f32
    %216 = vector.broadcast %cst_84 : f32 to vector<8x128xf32>
    %217 = arith.mulf %216, %215 : vector<8x128xf32>
    %cst_85 = arith.constant 5.000000e-01 : f32
    %218 = vector.broadcast %cst_85 : f32 to vector<8x128xf32>
    %219 = arith.addf %217, %218 : vector<8x128xf32>
    %220 = vector.extract_strided_slice %211 {offsets = [0, 128], sizes = [8, 128], strides = [1, 1]} : vector<8x512xf32> to vector<8x128xf32>
    %cst_86 = arith.constant 5.000000e-01 : f32
    %221 = vector.broadcast %cst_86 : f32 to vector<8x128xf32>
    %222 = arith.mulf %221, %220 : vector<8x128xf32>
    %223 = math.tanh %222 : vector<8x128xf32>
    %cst_87 = arith.constant 5.000000e-01 : f32
    %224 = vector.broadcast %cst_87 : f32 to vector<8x128xf32>
    %225 = arith.mulf %224, %223 : vector<8x128xf32>
    %cst_88 = arith.constant 5.000000e-01 : f32
    %226 = vector.broadcast %cst_88 : f32 to vector<8x128xf32>
    %227 = arith.addf %225, %226 : vector<8x128xf32>
    %228 = vector.extract_strided_slice %211 {offsets = [0, 256], sizes = [8, 128], strides = [1, 1]} : vector<8x512xf32> to vector<8x128xf32>
    %229 = math.tanh %228 : vector<8x128xf32>
    %230 = vector.extract_strided_slice %211 {offsets = [0, 384], sizes = [8, 128], strides = [1, 1]} : vector<8x512xf32> to vector<8x128xf32>
    %cst_89 = arith.constant 5.000000e-01 : f32
    %231 = vector.broadcast %cst_89 : f32 to vector<8x128xf32>
    %232 = arith.mulf %231, %230 : vector<8x128xf32>
    %233 = math.tanh %232 : vector<8x128xf32>
    %cst_90 = arith.constant 5.000000e-01 : f32
    %234 = vector.broadcast %cst_90 : f32 to vector<8x128xf32>
    %235 = arith.mulf %234, %233 : vector<8x128xf32>
    %cst_91 = arith.constant 5.000000e-01 : f32
    %236 = vector.broadcast %cst_91 : f32 to vector<8x128xf32>
    %237 = arith.addf %235, %236 : vector<8x128xf32>
    %238 = arith.mulf %227, %201 : vector<8x128xf32>
    %239 = arith.mulf %219, %229 : vector<8x128xf32>
    %240 = arith.addf %238, %239 : vector<8x128xf32>
    %241 = math.tanh %240 : vector<8x128xf32>
    %242 = arith.mulf %237, %241 : vector<8x128xf32>
    %c6_i32 = arith.constant 6 : i32
    %c8_i32_92 = arith.constant 8 : i32
    %243 = arith.muli %c6_i32, %c8_i32_92 : i32
    %244 = tpu.assume_multiple %243, 8 : i32
    %245 = arith.index_cast %244 : i32 to index
    %c0_93 = arith.constant 0 : index
    %246 = vector.load %arg7[%245, %c0_93] : memref<64x512xf32, #tpu.memory_space<vmem>>, vector<8x512xf32>
    %247 = arith.truncf %242 : vector<8x128xf32> to vector<8x128xbf16>
    %c0_94 = arith.constant 0 : index
    %c0_95 = arith.constant 0 : index
    %248 = vector.load %arg2[%c0_94, %c0_95] : memref<128x512xbf16, #tpu.memory_space<vmem>>, vector<128x512xbf16>
    %cst_96 = arith.constant dense<0.000000e+00> : vector<8x512xf32>
    %249 = tpu.matmul %247, %248, %cst_96 {dimension_numbers = #tpu.dot_dimension_numbers<[1], [0], [0], [1], [0, 0, 1, 1], [], []>} : vector<8x128xbf16>, vector<128x512xbf16>, vector<8x512xf32> -> vector<8x512xf32>
    %250 = arith.addf %246, %249 : vector<8x512xf32>
    %251 = vector.extract_strided_slice %250 {offsets = [0, 0], sizes = [8, 128], strides = [1, 1]} : vector<8x512xf32> to vector<8x128xf32>
    %cst_97 = arith.constant 5.000000e-01 : f32
    %252 = vector.broadcast %cst_97 : f32 to vector<8x128xf32>
    %253 = arith.mulf %252, %251 : vector<8x128xf32>
    %254 = math.tanh %253 : vector<8x128xf32>
    %cst_98 = arith.constant 5.000000e-01 : f32
    %255 = vector.broadcast %cst_98 : f32 to vector<8x128xf32>
    %256 = arith.mulf %255, %254 : vector<8x128xf32>
    %cst_99 = arith.constant 5.000000e-01 : f32
    %257 = vector.broadcast %cst_99 : f32 to vector<8x128xf32>
    %258 = arith.addf %256, %257 : vector<8x128xf32>
    %259 = vector.extract_strided_slice %250 {offsets = [0, 128], sizes = [8, 128], strides = [1, 1]} : vector<8x512xf32> to vector<8x128xf32>
    %cst_100 = arith.constant 5.000000e-01 : f32
    %260 = vector.broadcast %cst_100 : f32 to vector<8x128xf32>
    %261 = arith.mulf %260, %259 : vector<8x128xf32>
    %262 = math.tanh %261 : vector<8x128xf32>
    %cst_101 = arith.constant 5.000000e-01 : f32
    %263 = vector.broadcast %cst_101 : f32 to vector<8x128xf32>
    %264 = arith.mulf %263, %262 : vector<8x128xf32>
    %cst_102 = arith.constant 5.000000e-01 : f32
    %265 = vector.broadcast %cst_102 : f32 to vector<8x128xf32>
    %266 = arith.addf %264, %265 : vector<8x128xf32>
    %267 = vector.extract_strided_slice %250 {offsets = [0, 256], sizes = [8, 128], strides = [1, 1]} : vector<8x512xf32> to vector<8x128xf32>
    %268 = math.tanh %267 : vector<8x128xf32>
    %269 = vector.extract_strided_slice %250 {offsets = [0, 384], sizes = [8, 128], strides = [1, 1]} : vector<8x512xf32> to vector<8x128xf32>
    %cst_103 = arith.constant 5.000000e-01 : f32
    %270 = vector.broadcast %cst_103 : f32 to vector<8x128xf32>
    %271 = arith.mulf %270, %269 : vector<8x128xf32>
    %272 = math.tanh %271 : vector<8x128xf32>
    %cst_104 = arith.constant 5.000000e-01 : f32
    %273 = vector.broadcast %cst_104 : f32 to vector<8x128xf32>
    %274 = arith.mulf %273, %272 : vector<8x128xf32>
    %cst_105 = arith.constant 5.000000e-01 : f32
    %275 = vector.broadcast %cst_105 : f32 to vector<8x128xf32>
    %276 = arith.addf %274, %275 : vector<8x128xf32>
    %277 = arith.mulf %266, %240 : vector<8x128xf32>
    %278 = arith.mulf %258, %268 : vector<8x128xf32>
    %279 = arith.addf %277, %278 : vector<8x128xf32>
    %280 = math.tanh %279 : vector<8x128xf32>
    %281 = arith.mulf %276, %280 : vector<8x128xf32>
    %c7_i32 = arith.constant 7 : i32
    %c8_i32_106 = arith.constant 8 : i32
    %282 = arith.muli %c7_i32, %c8_i32_106 : i32
    %283 = tpu.assume_multiple %282, 8 : i32
    %284 = arith.index_cast %283 : i32 to index
    %c0_107 = arith.constant 0 : index
    %285 = vector.load %arg7[%284, %c0_107] : memref<64x512xf32, #tpu.memory_space<vmem>>, vector<8x512xf32>
    %286 = arith.truncf %281 : vector<8x128xf32> to vector<8x128xbf16>
    %c0_108 = arith.constant 0 : index
    %c0_109 = arith.constant 0 : index
    %287 = vector.load %arg2[%c0_108, %c0_109] : memref<128x512xbf16, #tpu.memory_space<vmem>>, vector<128x512xbf16>
    %cst_110 = arith.constant dense<0.000000e+00> : vector<8x512xf32>
    %288 = tpu.matmul %286, %287, %cst_110 {dimension_numbers = #tpu.dot_dimension_numbers<[1], [0], [0], [1], [0, 0, 1, 1], [], []>} : vector<8x128xbf16>, vector<128x512xbf16>, vector<8x512xf32> -> vector<8x512xf32>
    %289 = arith.addf %285, %288 : vector<8x512xf32>
    %290 = vector.extract_strided_slice %289 {offsets = [0, 0], sizes = [8, 128], strides = [1, 1]} : vector<8x512xf32> to vector<8x128xf32>
    %cst_111 = arith.constant 5.000000e-01 : f32
    %291 = vector.broadcast %cst_111 : f32 to vector<8x128xf32>
    %292 = arith.mulf %291, %290 : vector<8x128xf32>
    %293 = math.tanh %292 : vector<8x128xf32>
    %cst_112 = arith.constant 5.000000e-01 : f32
    %294 = vector.broadcast %cst_112 : f32 to vector<8x128xf32>
    %295 = arith.mulf %294, %293 : vector<8x128xf32>
    %cst_113 = arith.constant 5.000000e-01 : f32
    %296 = vector.broadcast %cst_113 : f32 to vector<8x128xf32>
    %297 = arith.addf %295, %296 : vector<8x128xf32>
    %298 = vector.extract_strided_slice %289 {offsets = [0, 128], sizes = [8, 128], strides = [1, 1]} : vector<8x512xf32> to vector<8x128xf32>
    %cst_114 = arith.constant 5.000000e-01 : f32
    %299 = vector.broadcast %cst_114 : f32 to vector<8x128xf32>
    %300 = arith.mulf %299, %298 : vector<8x128xf32>
    %301 = math.tanh %300 : vector<8x128xf32>
    %cst_115 = arith.constant 5.000000e-01 : f32
    %302 = vector.broadcast %cst_115 : f32 to vector<8x128xf32>
    %303 = arith.mulf %302, %301 : vector<8x128xf32>
    %cst_116 = arith.constant 5.000000e-01 : f32
    %304 = vector.broadcast %cst_116 : f32 to vector<8x128xf32>
    %305 = arith.addf %303, %304 : vector<8x128xf32>
    %306 = vector.extract_strided_slice %289 {offsets = [0, 256], sizes = [8, 128], strides = [1, 1]} : vector<8x512xf32> to vector<8x128xf32>
    %307 = math.tanh %306 : vector<8x128xf32>
    %308 = vector.extract_strided_slice %289 {offsets = [0, 384], sizes = [8, 128], strides = [1, 1]} : vector<8x512xf32> to vector<8x128xf32>
    %cst_117 = arith.constant 5.000000e-01 : f32
    %309 = vector.broadcast %cst_117 : f32 to vector<8x128xf32>
    %310 = arith.mulf %309, %308 : vector<8x128xf32>
    %311 = math.tanh %310 : vector<8x128xf32>
    %cst_118 = arith.constant 5.000000e-01 : f32
    %312 = vector.broadcast %cst_118 : f32 to vector<8x128xf32>
    %313 = arith.mulf %312, %311 : vector<8x128xf32>
    %cst_119 = arith.constant 5.000000e-01 : f32
    %314 = vector.broadcast %cst_119 : f32 to vector<8x128xf32>
    %315 = arith.addf %313, %314 : vector<8x128xf32>
    %316 = arith.mulf %305, %279 : vector<8x128xf32>
    %317 = arith.mulf %297, %307 : vector<8x128xf32>
    %318 = arith.addf %316, %317 : vector<8x128xf32>
    %319 = math.tanh %318 : vector<8x128xf32>
    %320 = arith.mulf %315, %319 : vector<8x128xf32>
    %c8_i32_120 = arith.constant 8 : i32
    %321 = arith.truncf %320 : vector<8x128xf32> to vector<8x128xbf16>
    %c0_121 = arith.constant 0 : index
    %c0_122 = arith.constant 0 : index
    %322 = vector.load %arg4[%c0_121, %c0_122] : memref<128x128xbf16, #tpu.memory_space<vmem>>, vector<128x128xbf16>
    %cst_123 = arith.constant dense<0.000000e+00> : vector<8x128xf32>
    %323 = tpu.matmul %321, %322, %cst_123 {dimension_numbers = #tpu.dot_dimension_numbers<[1], [0], [0], [1], [0, 0, 1, 1], [], []>} : vector<8x128xbf16>, vector<128x128xbf16>, vector<8x128xf32> -> vector<8x128xf32>
    %c0_124 = arith.constant 0 : index
    %c0_125 = arith.constant 0 : index
    %324 = vector.load %arg5[%c0_124, %c0_125] : memref<1x128xf32, #tpu.memory_space<vmem>>, vector<1x128xf32>
    %325 = vector.broadcast %324 : vector<1x128xf32> to vector<8x128xf32>
    %326 = arith.addf %323, %325 : vector<8x128xf32>
    %c0_126 = arith.constant 0 : index
    %c0_127 = arith.constant 0 : index
    %327 = vector.load %arg6[%c0_126, %c0_127] : memref<8x128xf32, #tpu.memory_space<vmem>>, vector<8x128xf32>
    tpu.vector_store %arg6[%c0_126, %c0_127], %326 {strides = array<i32>} : memref<8x128xf32, #tpu.memory_space<vmem>>, vector<8x128xf32>,
    return
  }
}

</mosaic_0001>

<llo_original>
// kernel: tpu_custom_call.1
$region0: #{tpu_custom_call.1}
  #allocation0 [shape = 'u32[]', space=smem, size = 0x4, offset = 0x4, fixed_abs, tag = 'smem constant byte address 0x4 - core index']
  #allocation1 [shape = 'u32[144,128]{1,0:T(1,128)}', space=vmem, size = 0x12000, scoped, tag = 'internal scratch']
  #allocation2 [shape = 'f32[64,512]{1,0:T(8,128)}', space=vmem, size = 0x20000, scoped, tag = 'scratch operand']
  %s0 = inlined_call_operand.hbm [shape: bf16[64,128], index: 0, kind: input, shape index: {}]
  %s1 = inlined_call_operand.hbm [shape: bf16[128,512], index: 1, kind: input, shape index: {}]
  %s2 = inlined_call_operand.hbm [shape: bf16[128,512], index: 2, kind: input, shape index: {}]
  %s3 = inlined_call_operand.vmem [shape: f32[1,512], index: 3, kind: input, shape index: {}]
  %s4 = inlined_call_operand.hbm [shape: bf16[128,128], index: 4, kind: input, shape index: {}]
  %s5 = inlined_call_operand.vmem [shape: f32[1,128], index: 5, kind: input, shape index: {}]
  %s6 = inlined_call_operand.hbm [shape: f32[8,128], index: 6, kind: output, shape index: {}]
  %s7 = sld [smem:[#allocation0]]
  $region50: #{tpu_custom_call.1} parent=0
    _
  %s9 = ssub.s32 1, %s7
  %s10 = scalar_select 0, %s9, %s7
  $region1: #{tpu_custom_call.1} parent=0
    #allocation3 [shape = 'u8[16384]{0}', space=vmem, size = 0x4000, scoped, tag = 'input window, operand 0, single buffered']
    #allocation4 [shape = 's32[1]{0}', space=sflag, size = 0x4, scoped, tag = 'scoped memory for tpu_custom_call.1']
    #allocation5 [shape = 's32[1]{0}', space=sflag, size = 0x4, scoped, tag = 'scoped memory for tpu_custom_call.1']
    #allocation6 [shape = 'u8[131072]{0}', space=vmem, size = 0x20000, scoped, tag = 'input window, operand 1, single buffered']
    #allocation7 [shape = 's32[1]{0}', space=sflag, size = 0x4, scoped, tag = 'scoped memory for tpu_custom_call.1']
    #allocation8 [shape = 'u8[131072]{0}', space=vmem, size = 0x20000, scoped, tag = 'input window, operand 2, single buffered']
    #allocation9 [shape = 'u8[32768]{0}', space=vmem, size = 0x8000, scoped, tag = 'input window, operand 4, single buffered']
    #allocation10 [shape = 's32[1]{0}', space=sflag, size = 0x4, scoped, tag = 'scoped memory for tpu_custom_call.1']
    #allocation11 [shape = 'u8[4096]{0}', space=vmem, size = 0x1000, scoped, tag = 'output window, operand 0, single buffered']
    %11 = vsyncpa [#allocation4], 0
    %12 = vsyncpa [#allocation7], 0
    %13 = vsyncpa [#allocation10], 0
    %14 = vsyncpa [#allocation5], 0
    // Predicated region
    $region2: #{tpu_custom_call.1} parent=1 // pred_check
      _
    $region3: #{tpu_custom_call.1} parent=1 // pred_check_branch
      %16 = sbr.rel (0) target = $region5
    $region4: #{tpu_custom_call.1} parent=1 // pred_region
      %s18 = ssub.s32 512, 512
      %19 = vsyncadd [#allocation4], %s18
      %s20 = sshll.u32 [#allocation3], 4
      %s21 = int_to_ptr.vmem [resolvable:$true] %s20
      %26 = dma.hbm_to_vmem [thread:$0]  %s0, 512, %s21, [#allocation4], 64, 64, 4
    $region5: #{tpu_custom_call.1} parent=1 // pred_fallthru
      _
    // Predicated region
    $region6: #{tpu_custom_call.1} parent=1 // pred_check
      _
    $region7: #{tpu_custom_call.1} parent=1 // pred_check_branch
      %28 = sbr.rel (0) target = $region9
    $region8: #{tpu_custom_call.1} parent=1 // pred_region
      %s30 = ssub.s32 4096, 4096
      %31 = vsyncadd [#allocation7], %s30
      %s32 = sshll.u32 [#allocation6], 4
      %s33 = int_to_ptr.vmem [resolvable:$true] %s32
      %38 = dma.hbm_to_vmem [thread:$0]  %s1, 4096, %s33, [#allocation7], 256, 256, 16
    $region9: #{tpu_custom_call.1} parent=1 // pred_fallthru
      _
    // Predicated region
    $region10: #{tpu_custom_call.1} parent=1 // pred_check
      _
    $region11: #{tpu_custom_call.1} parent=1 // pred_check_branch
      %40 = sbr.rel (0) target = $region13
    $region12: #{tpu_custom_call.1} parent=1 // pred_region
      %s42 = ssub.s32 4096, 4096
      %43 = vsyncadd [#allocation7], %s42
      %s44 = sshll.u32 [#allocation8], 4
      %s45 = int_to_ptr.vmem [resolvable:$true] %s44
      %50 = dma.hbm_to_vmem [thread:$0]  %s2, 4096, %s45, [#allocation7], 256, 256, 16
    $region13: #{tpu_custom_call.1} parent=1 // pred_fallthru
      _
    // Predicated region
    $region14: #{tpu_custom_call.1} parent=1 // pred_check
      _
    $region15: #{tpu_custom_call.1} parent=1 // pred_check_branch
      %52 = sbr.rel (0) target = $region17
    $region16: #{tpu_custom_call.1} parent=1 // pred_region
      _
    $region17: #{tpu_custom_call.1} parent=1 // pred_fallthru
      _
    // Predicated region
    $region18: #{tpu_custom_call.1} parent=1 // pred_check
      _
    $region19: #{tpu_custom_call.1} parent=1 // pred_check_branch
      %54 = sbr.rel (0) target = $region21
    $region20: #{tpu_custom_call.1} parent=1 // pred_region
      %s56 = ssub.s32 1024, 1024
      %57 = vsyncadd [#allocation10], %s56
      %s58 = sshll.u32 [#allocation9], 4
      %s59 = int_to_ptr.vmem [resolvable:$true] %s58
      %64 = dma.hbm_to_vmem [thread:$0]  %s4, 1024, %s59, [#allocation10], 64, 64, 4
    $region21: #{tpu_custom_call.1} parent=1 // pred_fallthru
      _
    // Predicated region
    $region22: #{tpu_custom_call.1} parent=1 // pred_check
      _
    $region23: #{tpu_custom_call.1} parent=1 // pred_check_branch
      %66 = sbr.rel (0) target = $region25
    $region24: #{tpu_custom_call.1} parent=1 // pred_region
      _
    $region25: #{tpu_custom_call.1} parent=1 // pred_fallthru
      _
    // Predicated region
    $region26: #{tpu_custom_call.1} parent=1 // pred_check
      _
    $region27: #{tpu_custom_call.1} parent=1 // pred_check_branch
      %68 = sbr.rel (0) target = $region29
    $region28: #{tpu_custom_call.1} parent=1 // pred_region
      %69 = dma.done [#allocation4], 512
    $region29: #{tpu_custom_call.1} parent=1 // pred_fallthru
      _
    // Predicated region
    $region30: #{tpu_custom_call.1} parent=1 // pred_check
      _
    $region31: #{tpu_custom_call.1} parent=1 // pred_check_branch
      %71 = sbr.rel (0) target = $region33
    $region32: #{tpu_custom_call.1} parent=1 // pred_region
      %72 = dma.done [#allocation7], 4096
    $region33: #{tpu_custom_call.1} parent=1 // pred_fallthru
      _
    // Predicated region
    $region34: #{tpu_custom_call.1} parent=1 // pred_check
      _
    $region35: #{tpu_custom_call.1} parent=1 // pred_check_branch
      %74 = sbr.rel (0) target = $region37
    $region36: #{tpu_custom_call.1} parent=1 // pred_region
      %75 = dma.done [#allocation7], 4096
    $region37: #{tpu_custom_call.1} parent=1 // pred_fallthru
      _
    // Predicated region
    $region38: #{tpu_custom_call.1} parent=1 // pred_check
      _
    $region39: #{tpu_custom_call.1} parent=1 // pred_check_branch
      %77 = sbr.rel (0) target = $region41
    $region40: #{tpu_custom_call.1} parent=1 // pred_region
      %78 = dma.done [#allocation10], 1024
    $region41: #{tpu_custom_call.1} parent=1 // pred_fallthru
      _
    %v80 = vld [vmem:[#allocation3] sm:$0xf]
    %v81 = vld [vmem:[#allocation3 + $0x4] sm:$0xf]
    %v82 = vld [vmem:[#allocation3 + $0x8] sm:$0xf]
    %v83 = vld [vmem:[#allocation3 + $0xc] sm:$0xf]
    %v84 = vld [vmem:[#allocation3 + $0x10] sm:$0xf]
    %v85 = vld [vmem:[#allocation3 + $0x14] sm:$0xf]
    %v86 = vld [vmem:[#allocation3 + $0x18] sm:$0xf]
    %v87 = vld [vmem:[#allocation3 + $0x1c] sm:$0xf]
    %v88 = vld [vmem:[#allocation6] sm:$0xff]
    %v89 = vld [vmem:[#allocation6 + $0x8] sm:$0xff]
    %v90 = vld [vmem:[#allocation6 + $0x10] sm:$0xff]
    %v91 = vld [vmem:[#allocation6 + $0x18] sm:$0xff]
    %v92 = vld [vmem:[#allocation6 + $0x20] sm:$0xff]
    %v93 = vld [vmem:[#allocation6 + $0x28] sm:$0xff]
    %v94 = vld [vmem:[#allocation6 + $0x30] sm:$0xff]
    %v95 = vld [vmem:[#allocation6 + $0x38] sm:$0xff]
    %v96 = vld [vmem:[#allocation6 + $0x40] sm:$0xff]
    %v97 = vld [vmem:[#allocation6 + $0x48] sm:$0xff]
    %v98 = vld [vmem:[#allocation6 + $0x50] sm:$0xff]
    %v99 = vld [vmem:[#allocation6 + $0x58] sm:$0xff]
    %v100 = vld [vmem:[#allocation6 + $0x60] sm:$0xff]
    %v101 = vld [vmem:[#allocation6 + $0x68] sm:$0xff]
    %v102 = vld [vmem:[#allocation6 + $0x70] sm:$0xff]
    %v103 = vld [vmem:[#allocation6 + $0x78] sm:$0xff]
    %v104 = vld [vmem:[#allocation6 + $0x80] sm:$0xff]
    %v105 = vld [vmem:[#allocation6 + $0x88] sm:$0xff]
    %v106 = vld [vmem:[#allocation6 + $0x90] sm:$0xff]
    %v107 = vld [vmem:[#allocation6 + $0x98] sm:$0xff]
    %v108 = vld [vmem:[#allocation6 + $0xa0] sm:$0xff]
    %v109 = vld [vmem:[#allocation6 + $0xa8] sm:$0xff]
    %v110 = vld [vmem:[#allocation6 + $0xb0] sm:$0xff]
    %v111 = vld [vmem:[#allocation6 + $0xb8] sm:$0xff]
    %v112 = vld [vmem:[#allocation6 + $0xc0] sm:$0xff]
    %v113 = vld [vmem:[#allocation6 + $0xc8] sm:$0xff]
    %v114 = vld [vmem:[#allocation6 + $0xd0] sm:$0xff]
    %v115 = vld [vmem:[#allocation6 + $0xd8] sm:$0xff]
    %v116 = vld [vmem:[#allocation6 + $0xe0] sm:$0xff]
    %v117 = vld [vmem:[#allocation6 + $0xe8] sm:$0xff]
    %v118 = vld [vmem:[#allocation6 + $0xf0] sm:$0xff]
    %v119 = vld [vmem:[#allocation6 + $0xf8] sm:$0xff]
    %v120 = vld [vmem:[%s3] sm:$0xf]
    %v122 = vlaneseq
    %v123 = vshrl.u32 %v122, 7
    %v124 = vsub.s32 0, %v123
    %v125 = vrot.slane %v120, %v124
    %v126 = vlaneseq
    %v127 = vshrl.u32 %v126, 7
    %v128 = vsub.s32 1, %v127
    %v129 = vrot.slane %v120, %v128
    %v130 = vlaneseq
    %v131 = vshrl.u32 %v130, 7
    %v132 = vsub.s32 2, %v131
    %v133 = vrot.slane %v120, %v132
    %v134 = vlaneseq
    %v135 = vshrl.u32 %v134, 7
    %v136 = vsub.s32 3, %v135
    %v137 = vrot.slane %v120, %v136
    %v150 = vunpack.c.l.b16 %v80
    %v151 = vunpack.c.l.b16 %v81
    %v152 = vunpack.c.l.b16 %v82
    %v153 = vunpack.c.l.b16 %v83
    %v154 = vunpack.c.l.b16 %v84
    %v155 = vunpack.c.l.b16 %v85
    %v156 = vunpack.c.l.b16 %v86
    %v157 = vunpack.c.l.b16 %v87
    %v158 = vpack.c.b16 %v151, %v150
    %v159 = vpack.c.b16 %v153, %v152
    %v160 = vpack.c.b16 %v155, %v154
    %v161 = vpack.c.b16 %v157, %v156
    %v198 = vunpack.c.l.b16 %v88
    %v199 = vunpack.c.h.b16 %v88
    %v200 = vunpack.c.l.b16 %v89
    %v201 = vunpack.c.h.b16 %v89
    %v202 = vunpack.c.l.b16 %v90
    %v203 = vunpack.c.h.b16 %v90
    %v204 = vunpack.c.l.b16 %v91
    %v205 = vunpack.c.h.b16 %v91
    %v206 = vunpack.c.l.b16 %v92
    %v207 = vunpack.c.h.b16 %v92
    %v208 = vunpack.c.l.b16 %v93
    %v209 = vunpack.c.h.b16 %v93
    %v210 = vunpack.c.l.b16 %v94
    %v211 = vunpack.c.h.b16 %v94
    %v212 = vunpack.c.l.b16 %v95
    %v213 = vunpack.c.h.b16 %v95
    %v214 = vunpack.c.l.b16 %v96
    %v215 = vunpack.c.h.b16 %v96
    %v216 = vunpack.c.l.b16 %v97
    %v217 = vunpack.c.h.b16 %v97
    %v218 = vunpack.c.l.b16 %v98
    %v219 = vunpack.c.h.b16 %v98
    %v220 = vunpack.c.l.b16 %v99
    %v221 = vunpack.c.h.b16 %v99
    %v222 = vunpack.c.l.b16 %v100
    %v223 = vunpack.c.h.b16 %v100
    %v224 = vunpack.c.l.b16 %v101
    %v225 = vunpack.c.h.b16 %v101
    %v226 = vunpack.c.l.b16 %v102
    %v227 = vunpack.c.h.b16 %v102
    %v228 = vunpack.c.l.b16 %v103
    %v229 = vunpack.c.h.b16 %v103
    %v230 = vunpack.c.l.b16 %v104
    %v231 = vunpack.c.h.b16 %v104
    %v232 = vunpack.c.l.b16 %v105
    %v233 = vunpack.c.h.b16 %v105
    %v234 = vunpack.c.l.b16 %v106
    %v235 = vunpack.c.h.b16 %v106
    %v236 = vunpack.c.l.b16 %v107
    %v237 = vunpack.c.h.b16 %v107
    %v238 = vunpack.c.l.b16 %v108
    %v239 = vunpack.c.h.b16 %v108
    %v240 = vunpack.c.l.b16 %v109
    %v241 = vunpack.c.h.b16 %v109
    %v242 = vunpack.c.l.b16 %v110
    %v243 = vunpack.c.h.b16 %v110
    %v244 = vunpack.c.l.b16 %v111
    %v245 = vunpack.c.h.b16 %v111
    %v246 = vunpack.c.l.b16 %v112
    %v247 = vunpack.c.h.b16 %v112
    %v248 = vunpack.c.l.b16 %v113
    %v249 = vunpack.c.h.b16 %v113
    %v250 = vunpack.c.l.b16 %v114
    %v251 = vunpack.c.h.b16 %v114
    %v252 = vunpack.c.l.b16 %v115
    %v253 = vunpack.c.h.b16 %v115
    %v254 = vunpack.c.l.b16 %v116
    %v255 = vunpack.c.h.b16 %v116
    %v256 = vunpack.c.l.b16 %v117
    %v257 = vunpack.c.h.b16 %v117
    %v258 = vunpack.c.l.b16 %v118
    %v259 = vunpack.c.h.b16 %v118
    %v260 = vunpack.c.l.b16 %v119
    %v261 = vunpack.c.h.b16 %v119
    %v262 = vpack.c.b16 %v202, %v198
    %v263 = vpack.c.b16 %v203, %v199
    %v264 = vpack.c.b16 %v204, %v200
    %v265 = vpack.c.b16 %v205, %v201
    %v266 = vpack.c.b16 %v210, %v206
    %v267 = vpack.c.b16 %v211, %v207
    %v268 = vpack.c.b16 %v212, %v208
    %v269 = vpack.c.b16 %v213, %v209
    %v270 = vpack.c.b16 %v218, %v214
    %v271 = vpack.c.b16 %v219, %v215
    %v272 = vpack.c.b16 %v220, %v216
    %v273 = vpack.c.b16 %v221, %v217
    %v274 = vpack.c.b16 %v226, %v222
    %v275 = vpack.c.b16 %v227, %v223
    %v276 = vpack.c.b16 %v228, %v224
    %v277 = vpack.c.b16 %v229, %v225
    %v278 = vpack.c.b16 %v234, %v230
    %v279 = vpack.c.b16 %v235, %v231
    %v280 = vpack.c.b16 %v236, %v232
    %v281 = vpack.c.b16 %v237, %v233
    %v282 = vpack.c.b16 %v242, %v238
    %v283 = vpack.c.b16 %v243, %v239
    %v284 = vpack.c.b16 %v244, %v240
    %v285 = vpack.c.b16 %v245, %v241
    %v286 = vpack.c.b16 %v250, %v246
    %v287 = vpack.c.b16 %v251, %v247
    %v288 = vpack.c.b16 %v252, %v248
    %v289 = vpack.c.b16 %v253, %v249
    %v290 = vpack.c.b16 %v258, %v254
    %v291 = vpack.c.b16 %v259, %v255
    %v292 = vpack.c.b16 %v260, %v256
    %v293 = vpack.c.b16 %v261, %v257
    %326 = vmatprep.subr.bf16.mxu0 %v263
    %327 = vmatpush1.bf16.msra.mxu0 %v262
    %328 = vmatprep.subr.bf16.mxu0 %v267
    %329 = vmatpush1.bf16.msra.mxu0 %v266
    %330 = vmatprep.subr.bf16.mxu0 %v271
    %331 = vmatpush1.bf16.msra.mxu0 %v270
    %332 = vmatprep.subr.bf16.mxu0 %v275
    %333 = vmatpush1.bf16.msra.mxu0 %v274
    %334 = vmatprep.subr.bf16.mxu0 %v279
    %335 = vmatpush1.bf16.msra.mxu0 %v278
    %336 = vmatprep.subr.bf16.mxu0 %v283
    %337 = vmatpush1.bf16.msra.mxu0 %v282
    %338 = vmatprep.subr.bf16.mxu0 %v287
    %339 = vmatpush1.bf16.msra.mxu0 %v286
    %340 = vmatprep.subr.bf16.mxu0 %v291
    %341 = vmatpush1.bf16.msra.mxu0 %v290
    %342 = vmatprep.subr.bf16.mxu0 0
    %343 = vmatpush1.bf16.msra.mxu0 0
    %344 = vmatprep.subr.bf16.mxu0 0
    %345 = vmatpush1.bf16.msra.mxu0 0
    %346 = vmatprep.subr.bf16.mxu0 0
    %347 = vmatpush1.bf16.msra.mxu0 0
    %348 = vmatprep.subr.bf16.mxu0 0
    %349 = vmatpush1.bf16.msra.mxu0 0
    %350 = vmatprep.subr.bf16.mxu0 0
    %351 = vmatpush1.bf16.msra.mxu0 0
    %352 = vmatprep.subr.bf16.mxu0 0
    %353 = vmatpush1.bf16.msra.mxu0 0
    %354 = vmatprep.subr.bf16.mxu0 0
    %355 = vmatpush1.bf16.msra.mxu0 0
    %356 = vmatprep.subr.bf16.mxu0 0
    %357 = vmatpush1.bf16.msra.mxu0 0
    %358 = vmatprep.mubr.bf16.mxu0 0
    %359 = vmatmul.mubr.bf16.gmra.mrb[0].mxu0 %v158
    %v360 = vpop.f32.mrb[0].mxu0
    %v361 = vadd.f32 %v125, %v360
    %v362 = vpop.f32.mrb[0].mxu0
    %v363 = vadd.f32 %v129, %v362
    %v364 = vpop.f32.mrb[0].mxu0
    %v365 = vadd.f32 %v125, %v364
    %v366 = vpop.f32.mrb[0].mxu0
    %v367 = vadd.f32 %v129, %v366
    %368 = vmatprep.mubr.bf16.mxu0 0
    %369 = vmatmul.mubr.bf16.gmra.mrb[0].mxu0 %v159
    %v370 = vpop.f32.mrb[0].mxu0
    %v371 = vadd.f32 %v125, %v370
    %v372 = vpop.f32.mrb[0].mxu0
    %v373 = vadd.f32 %v129, %v372
    %v374 = vpop.f32.mrb[0].mxu0
    %v375 = vadd.f32 %v125, %v374
    %v376 = vpop.f32.mrb[0].mxu0
    %v377 = vadd.f32 %v129, %v376
    %378 = vmatprep.mubr.bf16.mxu0 0
    %379 = vmatmul.mubr.bf16.gmra.mrb[0].mxu0 %v160
    %v380 = vpop.f32.mrb[0].mxu0
    %v381 = vadd.f32 %v125, %v380
    %v382 = vpop.f32.mrb[0].mxu0
    %v383 = vadd.f32 %v129, %v382
    %v384 = vpop.f32.mrb[0].mxu0
    %v385 = vadd.f32 %v125, %v384
    %v386 = vpop.f32.mrb[0].mxu0
    %v387 = vadd.f32 %v129, %v386
    %388 = vmatprep.mubr.bf16.mxu0 0
    %389 = vmatmul.mubr.bf16.gmra.mrb[0].mxu0 %v161
    %v390 = vpop.f32.mrb[0].mxu0
    %v391 = vadd.f32 %v125, %v390
    %v392 = vpop.f32.mrb[0].mxu0
    %v393 = vadd.f32 %v129, %v392
    %v394 = vpop.f32.mrb[0].mxu0
    %v395 = vadd.f32 %v125, %v394
    %v396 = vpop.f32.mrb[0].mxu0
    %v397 = vadd.f32 %v129, %v396
    %398 = vdwg.mxu0
    %399 = vmatprep.subr.bf16.mxu0 %v265
    %400 = vmatpush1.bf16.msra.mxu0 %v264
    %401 = vmatprep.subr.bf16.mxu0 %v269
    %402 = vmatpush1.bf16.msra.mxu0 %v268
    %403 = vmatprep.subr.bf16.mxu0 %v273
    %404 = vmatpush1.bf16.msra.mxu0 %v272
    %405 = vmatprep.subr.bf16.mxu0 %v277
    %406 = vmatpush1.bf16.msra.mxu0 %v276
    %407 = vmatprep.subr.bf16.mxu0 %v281
    %408 = vmatpush1.bf16.msra.mxu0 %v280
    %409 = vmatprep.subr.bf16.mxu0 %v285
    %410 = vmatpush1.bf16.msra.mxu0 %v284
    %411 = vmatprep.subr.bf16.mxu0 %v289
    %412 = vmatpush1.bf16.msra.mxu0 %v288
    %413 = vmatprep.subr.bf16.mxu0 %v293
    %414 = vmatpush1.bf16.msra.mxu0 %v292
    %415 = vmatprep.subr.bf16.mxu0 0
    %416 = vmatpush1.bf16.msra.mxu0 0
    %417 = vmatprep.subr.bf16.mxu0 0
    %418 = vmatpush1.bf16.msra.mxu0 0
    %419 = vmatprep.subr.bf16.mxu0 0
    %420 = vmatpush1.bf16.msra.mxu0 0
    %421 = vmatprep.subr.bf16.mxu0 0
    %422 = vmatpush1.bf16.msra.mxu0 0
    %423 = vmatprep.subr.bf16.mxu0 0
    %424 = vmatpush1.bf16.msra.mxu0 0
    %425 = vmatprep.subr.bf16.mxu0 0
    %426 = vmatpush1.bf16.msra.mxu0 0
    %427 = vmatprep.subr.bf16.mxu0 0
    %428 = vmatpush1.bf16.msra.mxu0 0
    %429 = vmatprep.subr.bf16.mxu0 0
    %430 = vmatpush1.bf16.msra.mxu0 0
    %431 = vmatprep.mubr.bf16.mxu0 0
    %432 = vmatmul.mubr.bf16.gmra.mrb[0].mxu0 %v158
    %v433 = vpop.f32.mrb[0].mxu0
    %v434 = vadd.f32 %v133, %v433
    %v435 = vpop.f32.mrb[0].mxu0
    %v436 = vadd.f32 %v137, %v435
    %v437 = vpop.f32.mrb[0].mxu0
    %v438 = vadd.f32 %v133, %v437
    %v439 = vpop.f32.mrb[0].mxu0
    %v440 = vadd.f32 %v137, %v439
    %441 = vmatprep.mubr.bf16.mxu0 0
    %442 = vmatmul.mubr.bf16.gmra.mrb[0].mxu0 %v159
    %v443 = vpop.f32.mrb[0].mxu0
    %v444 = vadd.f32 %v133, %v443
    %v445 = vpop.f32.mrb[0].mxu0
    %v446 = vadd.f32 %v137, %v445
    %v447 = vpop.f32.mrb[0].mxu0
    %v448 = vadd.f32 %v133, %v447
    %v449 = vpop.f32.mrb[0].mxu0
    %v450 = vadd.f32 %v137, %v449
    %451 = vmatprep.mubr.bf16.mxu0 0
    %452 = vmatmul.mubr.bf16.gmra.mrb[0].mxu0 %v160
    %v453 = vpop.f32.mrb[0].mxu0
    %v454 = vadd.f32 %v133, %v453
    %v455 = vpop.f32.mrb[0].mxu0
    %v456 = vadd.f32 %v137, %v455
    %v457 = vpop.f32.mrb[0].mxu0
    %v458 = vadd.f32 %v133, %v457
    %v459 = vpop.f32.mrb[0].mxu0
    %v460 = vadd.f32 %v137, %v459
    %461 = vmatprep.mubr.bf16.mxu0 0
    %462 = vmatmul.mubr.bf16.gmra.mrb[0].mxu0 %v161
    %v463 = vpop.f32.mrb[0].mxu0
    %v464 = vadd.f32 %v133, %v463
    %v465 = vpop.f32.mrb[0].mxu0
    %v466 = vadd.f32 %v137, %v465
    %v467 = vpop.f32.mrb[0].mxu0
    %v468 = vadd.f32 %v133, %v467
    %v469 = vpop.f32.mrb[0].mxu0
    %v470 = vadd.f32 %v137, %v469
    %471 = vdwg.mxu0
    %472 = vst [vmem:[#allocation2] sm:$0xff] %v361
    %473 = vst [vmem:[#allocation2 + $0x8] sm:$0xff] %v363
    %474 = vst [vmem:[#allocation2 + $0x10] sm:$0xff] %v434
    %475 = vst [vmem:[#allocation2 + $0x18] sm:$0xff] %v436
    %476 = vst [vmem:[#allocation2 + $0x20] sm:$0xff] %v365
    %477 = vst [vmem:[#allocation2 + $0x28] sm:$0xff] %v367
    %478 = vst [vmem:[#allocation2 + $0x30] sm:$0xff] %v438
    %479 = vst [vmem:[#allocation2 + $0x38] sm:$0xff] %v440
    %480 = vst [vmem:[#allocation2 + $0x40] sm:$0xff] %v371
    %481 = vst [vmem:[#allocation2 + $0x48] sm:$0xff] %v373
    %482 = vst [vmem:[#allocation2 + $0x50] sm:$0xff] %v444
    %483 = vst [vmem:[#allocation2 + $0x58] sm:$0xff] %v446
    %484 = vst [vmem:[#allocation2 + $0x60] sm:$0xff] %v375
    %485 = vst [vmem:[#allocation2 + $0x68] sm:$0xff] %v377
    %486 = vst [vmem:[#allocation2 + $0x70] sm:$0xff] %v448
    %487 = vst [vmem:[#allocation2 + $0x78] sm:$0xff] %v450
    %488 = vst [vmem:[#allocation2 + $0x80] sm:$0xff] %v381
    %489 = vst [vmem:[#allocation2 + $0x88] sm:$0xff] %v383
    %490 = vst [vmem:[#allocation2 + $0x90] sm:$0xff] %v454
    %491 = vst [vmem:[#allocation2 + $0x98] sm:$0xff] %v456
    %492 = vst [vmem:[#allocation2 + $0xa0] sm:$0xff] %v385
    %493 = vst [vmem:[#allocation2 + $0xa8] sm:$0xff] %v387
    %494 = vst [vmem:[#allocation2 + $0xb0] sm:$0xff] %v458
    %495 = vst [vmem:[#allocation2 + $0xb8] sm:$0xff] %v460
    %496 = vst [vmem:[#allocation2 + $0xc0] sm:$0xff] %v391
    %497 = vst [vmem:[#allocation2 + $0xc8] sm:$0xff] %v393
    %498 = vst [vmem:[#allocation2 + $0xd0] sm:$0xff] %v464
    %499 = vst [vmem:[#allocation2 + $0xd8] sm:$0xff] %v466
    %500 = vst [vmem:[#allocation2 + $0xe0] sm:$0xff] %v395
    %501 = vst [vmem:[#allocation2 + $0xe8] sm:$0xff] %v397
    %502 = vst [vmem:[#allocation2 + $0xf0] sm:$0xff] %v468
    %503 = vst [vmem:[#allocation2 + $0xf8] sm:$0xff] %v470
    %s504 = smul.u32 0, 4
    %s505 = smul.addr %s504, 8
    %s506 = scalar_lea.vmem [#allocation2], %s505
    %v507 = vld [vmem:[%s506] sm:$0xff]
    %v508 = vld [vmem:[%s506 + $0x8] sm:$0xff]
    %v509 = vld [vmem:[%s506 + $0x10] sm:$0xff]
    %v510 = vld [vmem:[%s506 + $0x18] sm:$0xff]
    %v511 = vld [vmem:[#allocation8] sm:$0xff]
    %v512 = vld [vmem:[#allocation8 + $0x8] sm:$0xff]
    %v513 = vld [vmem:[#allocation8 + $0x10] sm:$0xff]
    %v514 = vld [vmem:[#allocation8 + $0x18] sm:$0xff]
    %v515 = vld [vmem:[#allocation8 + $0x20] sm:$0xff]
    %v516 = vld [vmem:[#allocation8 + $0x28] sm:$0xff]
    %v517 = vld [vmem:[#allocation8 + $0x30] sm:$0xff]
    %v518 = vld [vmem:[#allocation8 + $0x38] sm:$0xff]
    %v519 = vld [vmem:[#allocation8 + $0x40] sm:$0xff]
    %v520 = vld [vmem:[#allocation8 + $0x48] sm:$0xff]
    %v521 = vld [vmem:[#allocation8 + $0x50] sm:$0xff]
    %v522 = vld [vmem:[#allocation8 + $0x58] sm:$0xff]
    %v523 = vld [vmem:[#allocation8 + $0x60] sm:$0xff]
    %v524 = vld [vmem:[#allocation8 + $0x68] sm:$0xff]
    %v525 = vld [vmem:[#allocation8 + $0x70] sm:$0xff]
    %v526 = vld [vmem:[#allocation8 + $0x78] sm:$0xff]
    %v527 = vld [vmem:[#allocation8 + $0x80] sm:$0xff]
    %v528 = vld [vmem:[#allocation8 + $0x88] sm:$0xff]
    %v529 = vld [vmem:[#allocation8 + $0x90] sm:$0xff]
    %v530 = vld [vmem:[#allocation8 + $0x98] sm:$0xff]
    %v531 = vld [vmem:[#allocation8 + $0xa0] sm:$0xff]
    %v532 = vld [vmem:[#allocation8 + $0xa8] sm:$0xff]
    %v533 = vld [vmem:[#allocation8 + $0xb0] sm:$0xff]
    %v534 = vld [vmem:[#allocation8 + $0xb8] sm:$0xff]
    %v535 = vld [vmem:[#allocation8 + $0xc0] sm:$0xff]
    %v536 = vld [vmem:[#allocation8 + $0xc8] sm:$0xff]
    %v537 = vld [vmem:[#allocation8 + $0xd0] sm:$0xff]
    %v538 = vld [vmem:[#allocation8 + $0xd8] sm:$0xff]
    %v539 = vld [vmem:[#allocation8 + $0xe0] sm:$0xff]
    %v540 = vld [vmem:[#allocation8 + $0xe8] sm:$0xff]
    %v541 = vld [vmem:[#allocation8 + $0xf0] sm:$0xff]
    %v542 = vld [vmem:[#allocation8 + $0xf8] sm:$0xff]
    %v575 = vunpack.c.l.b16 %v511
    %v576 = vunpack.c.h.b16 %v511
    %v577 = vunpack.c.l.b16 %v512
    %v578 = vunpack.c.h.b16 %v512
    %v579 = vunpack.c.l.b16 %v513
    %v580 = vunpack.c.h.b16 %v513
    %v581 = vunpack.c.l.b16 %v514
    %v582 = vunpack.c.h.b16 %v514
    %v583 = vunpack.c.l.b16 %v515
    %v584 = vunpack.c.h.b16 %v515
    %v585 = vunpack.c.l.b16 %v516
    %v586 = vunpack.c.h.b16 %v516
    %v587 = vunpack.c.l.b16 %v517
    %v588 = vunpack.c.h.b16 %v517
    %v589 = vunpack.c.l.b16 %v518
    %v590 = vunpack.c.h.b16 %v518
    %v591 = vunpack.c.l.b16 %v519
    %v592 = vunpack.c.h.b16 %v519
    %v593 = vunpack.c.l.b16 %v520
    %v594 = vunpack.c.h.b16 %v520
    %v595 = vunpack.c.l.b16 %v521
    %v596 = vunpack.c.h.b16 %v521
    %v597 = vunpack.c.l.b16 %v522
    %v598 = vunpack.c.h.b16 %v522
    %v599 = vunpack.c.l.b16 %v523
    %v600 = vunpack.c.h.b16 %v523
    %v601 = vunpack.c.l.b16 %v524
    %v602 = vunpack.c.h.b16 %v524
    %v603 = vunpack.c.l.b16 %v525
    %v604 = vunpack.c.h.b16 %v525
    %v605 = vunpack.c.l.b16 %v526
    %v606 = vunpack.c.h.b16 %v526
    %v607 = vunpack.c.l.b16 %v527
    %v608 = vunpack.c.h.b16 %v527
    %v609 = vunpack.c.l.b16 %v528
    %v610 = vunpack.c.h.b16 %v528
    %v611 = vunpack.c.l.b16 %v529
    %v612 = vunpack.c.h.b16 %v529
    %v613 = vunpack.c.l.b16 %v530
    %v614 = vunpack.c.h.b16 %v530
    %v615 = vunpack.c.l.b16 %v531
    %v616 = vunpack.c.h.b16 %v531
    %v617 = vunpack.c.l.b16 %v532
    %v618 = vunpack.c.h.b16 %v532
    %v619 = vunpack.c.l.b16 %v533
    %v620 = vunpack.c.h.b16 %v533
    %v621 = vunpack.c.l.b16 %v534
    %v622 = vunpack.c.h.b16 %v534
    %v623 = vunpack.c.l.b16 %v535
    %v624 = vunpack.c.h.b16 %v535
    %v625 = vunpack.c.l.b16 %v536
    %v626 = vunpack.c.h.b16 %v536
    %v627 = vunpack.c.l.b16 %v537
    %v628 = vunpack.c.h.b16 %v537
    %v629 = vunpack.c.l.b16 %v538
    %v630 = vunpack.c.h.b16 %v538
    %v631 = vunpack.c.l.b16 %v539
    %v632 = vunpack.c.h.b16 %v539
    %v633 = vunpack.c.l.b16 %v540
    %v634 = vunpack.c.h.b16 %v540
    %v635 = vunpack.c.l.b16 %v541
    %v636 = vunpack.c.h.b16 %v541
    %v637 = vunpack.c.l.b16 %v542
    %v638 = vunpack.c.h.b16 %v542
    %v639 = vpack.c.b16 %v579, %v575
    %v640 = vpack.c.b16 %v580, %v576
    %v641 = vpack.c.b16 %v581, %v577
    %v642 = vpack.c.b16 %v582, %v578
    %v643 = vpack.c.b16 %v587, %v583
    %v644 = vpack.c.b16 %v588, %v584
    %v645 = vpack.c.b16 %v589, %v585
    %v646 = vpack.c.b16 %v590, %v586
    %v647 = vpack.c.b16 %v595, %v591
    %v648 = vpack.c.b16 %v596, %v592
    %v649 = vpack.c.b16 %v597, %v593
    %v650 = vpack.c.b16 %v598, %v594
    %v651 = vpack.c.b16 %v603, %v599
    %v652 = vpack.c.b16 %v604, %v600
    %v653 = vpack.c.b16 %v605, %v601
    %v654 = vpack.c.b16 %v606, %v602
    %v655 = vpack.c.b16 %v611, %v607
    %v656 = vpack.c.b16 %v612, %v608
    %v657 = vpack.c.b16 %v613, %v609
    %v658 = vpack.c.b16 %v614, %v610
    %v659 = vpack.c.b16 %v619, %v615
    %v660 = vpack.c.b16 %v620, %v616
    %v661 = vpack.c.b16 %v621, %v617
    %v662 = vpack.c.b16 %v622, %v618
    %v663 = vpack.c.b16 %v627, %v623
    %v664 = vpack.c.b16 %v628, %v624
    %v665 = vpack.c.b16 %v629, %v625
    %v666 = vpack.c.b16 %v630, %v626
    %v667 = vpack.c.b16 %v635, %v631
    %v668 = vpack.c.b16 %v636, %v632
    %v669 = vpack.c.b16 %v637, %v633
    %v670 = vpack.c.b16 %v638, %v634
    %703 = vmatprep.subr.bf16.mxu0 %v640
    %704 = vmatpush1.bf16.msra.mxu0 %v639
    %705 = vmatprep.subr.bf16.mxu0 %v644
    %706 = vmatpush1.bf16.msra.mxu0 %v643
    %707 = vmatprep.subr.bf16.mxu0 %v648
    %708 = vmatpush1.bf16.msra.mxu0 %v647
    %709 = vmatprep.subr.bf16.mxu0 %v652
    %710 = vmatpush1.bf16.msra.mxu0 %v651
    %711 = vmatprep.subr.bf16.mxu0 %v656
    %712 = vmatpush1.bf16.msra.mxu0 %v655
    %713 = vmatprep.subr.bf16.mxu0 %v660
    %714 = vmatpush1.bf16.msra.mxu0 %v659
    %715 = vmatprep.subr.bf16.mxu0 %v664
    %716 = vmatpush1.bf16.msra.mxu0 %v663
    %717 = vmatprep.subr.bf16.mxu0 %v668
    %718 = vmatpush1.bf16.msra.mxu0 %v667
    %719 = vmatprep.subr.bf16.mxu0 0
    %720 = vmatpush1.bf16.msra.mxu0 0
    %721 = vmatprep.subr.bf16.mxu0 0
    %722 = vmatpush1.bf16.msra.mxu0 0
    %723 = vmatprep.subr.bf16.mxu0 0
    %724 = vmatpush1.bf16.msra.mxu0 0
    %725 = vmatprep.subr.bf16.mxu0 0
    %726 = vmatpush1.bf16.msra.mxu0 0
    %727 = vmatprep.subr.bf16.mxu0 0
    %728 = vmatpush1.bf16.msra.mxu0 0
    %729 = vmatprep.subr.bf16.mxu0 0
    %730 = vmatpush1.bf16.msra.mxu0 0
    %731 = vmatprep.subr.bf16.mxu0 0
    %732 = vmatpush1.bf16.msra.mxu0 0
    %733 = vmatprep.subr.bf16.mxu0 0
    %734 = vmatpush1.bf16.msra.mxu0 0
    %735 = vmatprep.mubr.bf16.mxu0 0
    %736 = vmatmul.mubr.bf16.gmra.mrb[0].mxu0 0
    %v737 = vpop.f32.mrb[0].mxu0
    %v738 = vadd.f32 0.0, %v737
    %v739 = vpop.f32.mrb[0].mxu0
    %v740 = vadd.f32 0.0, %v739
    %v741 = vpop.f32.mrb[0].mxu0
    %v742 = vpop.f32.mrb[0].mxu0
    %743 = vdwg.mxu0
    %744 = vmatprep.subr.bf16.mxu0 %v642
    %745 = vmatpush1.bf16.msra.mxu0 %v641
    %746 = vmatprep.subr.bf16.mxu0 %v646
    %747 = vmatpush1.bf16.msra.mxu0 %v645
    %748 = vmatprep.subr.bf16.mxu0 %v650
    %749 = vmatpush1.bf16.msra.mxu0 %v649
    %750 = vmatprep.subr.bf16.mxu0 %v654
    %751 = vmatpush1.bf16.msra.mxu0 %v653
    %752 = vmatprep.subr.bf16.mxu0 %v658
    %753 = vmatpush1.bf16.msra.mxu0 %v657
    %754 = vmatprep.subr.bf16.mxu0 %v662
    %755 = vmatpush1.bf16.msra.mxu0 %v661
    %756 = vmatprep.subr.bf16.mxu0 %v666
    %757 = vmatpush1.bf16.msra.mxu0 %v665
    %758 = vmatprep.subr.bf16.mxu0 %v670
    %759 = vmatpush1.bf16.msra.mxu0 %v669
    %760 = vmatprep.subr.bf16.mxu0 0
    %761 = vmatpush1.bf16.msra.mxu0 0
    %762 = vmatprep.subr.bf16.mxu0 0
    %763 = vmatpush1.bf16.msra.mxu0 0
    %764 = vmatprep.subr.bf16.mxu0 0
    %765 = vmatpush1.bf16.msra.mxu0 0
    %766 = vmatprep.subr.bf16.mxu0 0
    %767 = vmatpush1.bf16.msra.mxu0 0
    %768 = vmatprep.subr.bf16.mxu0 0
    %769 = vmatpush1.bf16.msra.mxu0 0
    %770 = vmatprep.subr.bf16.mxu0 0
    %771 = vmatpush1.bf16.msra.mxu0 0
    %772 = vmatprep.subr.bf16.mxu0 0
    %773 = vmatpush1.bf16.msra.mxu0 0
    %774 = vmatprep.subr.bf16.mxu0 0
    %775 = vmatpush1.bf16.msra.mxu0 0
    %776 = vmatprep.mubr.bf16.mxu0 0
    %777 = vmatmul.mubr.bf16.gmra.mrb[0].mxu0 0
    %v778 = vpop.f32.mrb[0].mxu0
    %v779 = vadd.f32 0.0, %v778
    %v780 = vpop.f32.mrb[0].mxu0
    %v781 = vadd.f32 0.0, %v780
    %v782 = vpop.f32.mrb[0].mxu0
    %v783 = vpop.f32.mrb[0].mxu0
    %784 = vdwg.mxu0
    %v785 = vadd.f32 %v507, %v738
    %v786 = vadd.f32 %v508, %v740
    %v787 = vadd.f32 %v509, %v779
    %v788 = vadd.f32 %v510, %v781
    %v789 = vmul.f32 %v785, 0.5
    %v790 = vtanh.pop %v789
    %v791 = vmul.f32 %v790, 0.5
    %v792 = vadd.f32 %v791, 0.5
    %v793 = vmul.f32 %v786, 0.5
    %v794 = vtanh.pop %v793
    %v795 = vmul.f32 %v794, 0.5
    %v796 = vadd.f32 %v795, 0.5
    %v797 = vtanh.pop %v787
    %v798 = vmul.f32 %v788, 0.5
    %v799 = vtanh.pop %v798
    %v800 = vmul.f32 %v799, 0.5
    %v801 = vadd.f32 %v800, 0.5
    %v802 = vmul.f32 %v796, 0.0
    %v803 = vmul.f32 %v792, %v797
    %v804 = vadd.f32 %v802, %v803
    %v805 = vtanh.pop %v804
    %v806 = vmul.f32 %v801, %v805
    %s807 = smul.u32 1, 4
    %s808 = smul.addr %s807, 8
    %s809 = scalar_lea.vmem [#allocation2], %s808
    %v810 = vld [vmem:[%s809] sm:$0xff]
    %v811 = vld [vmem:[%s809 + $0x8] sm:$0xff]
    %v812 = vld [vmem:[%s809 + $0x10] sm:$0xff]
    %v813 = vld [vmem:[%s809 + $0x18] sm:$0xff]
    %v814 = vpack.c.bf16 %v806, %v806
    %815 = vmatprep.subr.bf16.mxu0 %v640
    %816 = vmatpush1.bf16.msra.mxu0 %v639
    %817 = vmatprep.subr.bf16.mxu0 %v644
    %818 = vmatpush1.bf16.msra.mxu0 %v643
    %819 = vmatprep.subr.bf16.mxu0 %v648
    %820 = vmatpush1.bf16.msra.mxu0 %v647
    %821 = vmatprep.subr.bf16.mxu0 %v652
    %822 = vmatpush1.bf16.msra.mxu0 %v651
    %823 = vmatprep.subr.bf16.mxu0 %v656
    %824 = vmatpush1.bf16.msra.mxu0 %v655
    %825 = vmatprep.subr.bf16.mxu0 %v660
    %826 = vmatpush1.bf16.msra.mxu0 %v659
    %827 = vmatprep.subr.bf16.mxu0 %v664
    %828 = vmatpush1.bf16.msra.mxu0 %v663
    %829 = vmatprep.subr.bf16.mxu0 %v668
    %830 = vmatpush1.bf16.msra.mxu0 %v667
    %831 = vmatprep.subr.bf16.mxu0 0
    %832 = vmatpush1.bf16.msra.mxu0 0
    %833 = vmatprep.subr.bf16.mxu0 0
    %834 = vmatpush1.bf16.msra.mxu0 0
    %835 = vmatprep.subr.bf16.mxu0 0
    %836 = vmatpush1.bf16.msra.mxu0 0
    %837 = vmatprep.subr.bf16.mxu0 0
    %838 = vmatpush1.bf16.msra.mxu0 0
    %839 = vmatprep.subr.bf16.mxu0 0
    %840 = vmatpush1.bf16.msra.mxu0 0
    %841 = vmatprep.subr.bf16.mxu0 0
    %842 = vmatpush1.bf16.msra.mxu0 0
    %843 = vmatprep.subr.bf16.mxu0 0
    %844 = vmatpush1.bf16.msra.mxu0 0
    %845 = vmatprep.subr.bf16.mxu0 0
    %846 = vmatpush1.bf16.msra.mxu0 0
    %847 = vmatprep.mubr.bf16.mxu0 0
    %848 = vmatmul.mubr.bf16.gmra.mrb[0].mxu0 %v814
    %v849 = vpop.f32.mrb[0].mxu0
    %v850 = vadd.f32 0.0, %v849
    %v851 = vpop.f32.mrb[0].mxu0
    %v852 = vadd.f32 0.0, %v851
    %v853 = vpop.f32.mrb[0].mxu0
    %v854 = vpop.f32.mrb[0].mxu0
    %855 = vdwg.mxu0
    %856 = vmatprep.subr.bf16.mxu0 %v642
    %857 = vmatpush1.bf16.msra.mxu0 %v641
    %858 = vmatprep.subr.bf16.mxu0 %v646
    %859 = vmatpush1.bf16.msra.mxu0 %v645
    %860 = vmatprep.subr.bf16.mxu0 %v650
    %861 = vmatpush1.bf16.msra.mxu0 %v649
    %862 = vmatprep.subr.bf16.mxu0 %v654
    %863 = vmatpush1.bf16.msra.mxu0 %v653
    %864 = vmatprep.subr.bf16.mxu0 %v658
    %865 = vmatpush1.bf16.msra.mxu0 %v657
    %866 = vmatprep.subr.bf16.mxu0 %v662
    %867 = vmatpush1.bf16.msra.mxu0 %v661
    %868 = vmatprep.subr.bf16.mxu0 %v666
    %869 = vmatpush1.bf16.msra.mxu0 %v665
    %870 = vmatprep.subr.bf16.mxu0 %v670
    %871 = vmatpush1.bf16.msra.mxu0 %v669
    %872 = vmatprep.subr.bf16.mxu0 0
    %873 = vmatpush1.bf16.msra.mxu0 0
    %874 = vmatprep.subr.bf16.mxu0 0
    %875 = vmatpush1.bf16.msra.mxu0 0
    %876 = vmatprep.subr.bf16.mxu0 0
    %877 = vmatpush1.bf16.msra.mxu0 0
    %878 = vmatprep.subr.bf16.mxu0 0
    %879 = vmatpush1.bf16.msra.mxu0 0
    %880 = vmatprep.subr.bf16.mxu0 0
    %881 = vmatpush1.bf16.msra.mxu0 0
    %882 = vmatprep.subr.bf16.mxu0 0
    %883 = vmatpush1.bf16.msra.mxu0 0
    %884 = vmatprep.subr.bf16.mxu0 0
    %885 = vmatpush1.bf16.msra.mxu0 0
    %886 = vmatprep.subr.bf16.mxu0 0
    %887 = vmatpush1.bf16.msra.mxu0 0
    %888 = vmatprep.mubr.bf16.mxu0 0
    %889 = vmatmul.mubr.bf16.gmra.mrb[0].mxu0 %v814
    %v890 = vpop.f32.mrb[0].mxu0
    %v891 = vadd.f32 0.0, %v890
    %v892 = vpop.f32.mrb[0].mxu0
    %v893 = vadd.f32 0.0, %v892
    %v894 = vpop.f32.mrb[0].mxu0
    %v895 = vpop.f32.mrb[0].mxu0
    %896 = vdwg.mxu0
    %v897 = vadd.f32 %v810, %v850
    %v898 = vadd.f32 %v811, %v852
    %v899 = vadd.f32 %v812, %v891
    %v900 = vadd.f32 %v813, %v893
    %v901 = vmul.f32 %v897, 0.5
    %v902 = vtanh.pop %v901
    %v903 = vmul.f32 %v902, 0.5
    %v904 = vadd.f32 %v903, 0.5
    %v905 = vmul.f32 %v898, 0.5
    %v906 = vtanh.pop %v905
    %v907 = vmul.f32 %v906, 0.5
    %v908 = vadd.f32 %v907, 0.5
    %v909 = vtanh.pop %v899
    %v910 = vmul.f32 %v900, 0.5
    %v911 = vtanh.pop %v910
    %v912 = vmul.f32 %v911, 0.5
    %v913 = vadd.f32 %v912, 0.5
    %v914 = vmul.f32 %v908, %v804
    %v915 = vmul.f32 %v904, %v909
    %v916 = vadd.f32 %v914, %v915
    %v917 = vtanh.pop %v916
    %v918 = vmul.f32 %v913, %v917
    %s919 = smul.u32 2, 4
    %s920 = smul.addr %s919, 8
    %s921 = scalar_lea.vmem [#allocation2], %s920
    %v922 = vld [vmem:[%s921] sm:$0xff]
    %v923 = vld [vmem:[%s921 + $0x8] sm:$0xff]
    %v924 = vld [vmem:[%s921 + $0x10] sm:$0xff]
    %v925 = vld [vmem:[%s921 + $0x18] sm:$0xff]
    %v926 = vpack.c.bf16 %v918, %v918
    %927 = vmatprep.subr.bf16.mxu0 %v640
    %928 = vmatpush1.bf16.msra.mxu0 %v639
    %929 = vmatprep.subr.bf16.mxu0 %v644
    %930 = vmatpush1.bf16.msra.mxu0 %v643
    %931 = vmatprep.subr.bf16.mxu0 %v648
    %932 = vmatpush1.bf16.msra.mxu0 %v647
    %933 = vmatprep.subr.bf16.mxu0 %v652
    %934 = vmatpush1.bf16.msra.mxu0 %v651
    %935 = vmatprep.subr.bf16.mxu0 %v656
    %936 = vmatpush1.bf16.msra.mxu0 %v655
    %937 = vmatprep.subr.bf16.mxu0 %v660
    %938 = vmatpush1.bf16.msra.mxu0 %v659
    %939 = vmatprep.subr.bf16.mxu0 %v664
    %940 = vmatpush1.bf16.msra.mxu0 %v663
    %941 = vmatprep.subr.bf16.mxu0 %v668
    %942 = vmatpush1.bf16.msra.mxu0 %v667
    %943 = vmatprep.subr.bf16.mxu0 0
    %944 = vmatpush1.bf16.msra.mxu0 0
    %945 = vmatprep.subr.bf16.mxu0 0
    %946 = vmatpush1.bf16.msra.mxu0 0
    %947 = vmatprep.subr.bf16.mxu0 0
    %948 = vmatpush1.bf16.msra.mxu0 0
    %949 = vmatprep.subr.bf16.mxu0 0
    %950 = vmatpush1.bf16.msra.mxu0 0
    %951 = vmatprep.subr.bf16.mxu0 0
    %952 = vmatpush1.bf16.msra.mxu0 0
    %953 = vmatprep.subr.bf16.mxu0 0
    %954 = vmatpush1.bf16.msra.mxu0 0
    %955 = vmatprep.subr.bf16.mxu0 0
    %956 = vmatpush1.bf16.msra.mxu0 0
    %957 = vmatprep.subr.bf16.mxu0 0
    %958 = vmatpush1.bf16.msra.mxu0 0
    %959 = vmatprep.mubr.bf16.mxu0 0
    %960 = vmatmul.mubr.bf16.gmra.mrb[0].mxu0 %v926
    %v961 = vpop.f32.mrb[0].mxu0
    %v962 = vadd.f32 0.0, %v961
    %v963 = vpop.f32.mrb[0].mxu0
    %v964 = vadd.f32 0.0, %v963
    %v965 = vpop.f32.mrb[0].mxu0
    %v966 = vpop.f32.mrb[0].mxu0
    %967 = vdwg.mxu0
    %968 = vmatprep.subr.bf16.mxu0 %v642
    %969 = vmatpush1.bf16.msra.mxu0 %v641
    %970 = vmatprep.subr.bf16.mxu0 %v646
    %971 = vmatpush1.bf16.msra.mxu0 %v645
    %972 = vmatprep.subr.bf16.mxu0 %v650
    %973 = vmatpush1.bf16.msra.mxu0 %v649
    %974 = vmatprep.subr.bf16.mxu0 %v654
    %975 = vmatpush1.bf16.msra.mxu0 %v653
    %976 = vmatprep.subr.bf16.mxu0 %v658
    %977 = vmatpush1.bf16.msra.mxu0 %v657
    %978 = vmatprep.subr.bf16.mxu0 %v662
    %979 = vmatpush1.bf16.msra.mxu0 %v661
    %980 = vmatprep.subr.bf16.mxu0 %v666
    %981 = vmatpush1.bf16.msra.mxu0 %v665
    %982 = vmatprep.subr.bf16.mxu0 %v670
    %983 = vmatpush1.bf16.msra.mxu0 %v669
    %984 = vmatprep.subr.bf16.mxu0 0
    %985 = vmatpush1.bf16.msra.mxu0 0
    %986 = vmatprep.subr.bf16.mxu0 0
    %987 = vmatpush1.bf16.msra.mxu0 0
    %988 = vmatprep.subr.bf16.mxu0 0
    %989 = vmatpush1.bf16.msra.mxu0 0
    %990 = vmatprep.subr.bf16.mxu0 0
    %991 = vmatpush1.bf16.msra.mxu0 0
    %992 = vmatprep.subr.bf16.mxu0 0
    %993 = vmatpush1.bf16.msra.mxu0 0
    %994 = vmatprep.subr.bf16.mxu0 0
    %995 = vmatpush1.bf16.msra.mxu0 0
    %996 = vmatprep.subr.bf16.mxu0 0
    %997 = vmatpush1.bf16.msra.mxu0 0
    %998 = vmatprep.subr.bf16.mxu0 0
    %999 = vmatpush1.bf16.msra.mxu0 0
    %1000 = vmatprep.mubr.bf16.mxu0 0
    %1001 = vmatmul.mubr.bf16.gmra.mrb[0].mxu0 %v926
    %v1002 = vpop.f32.mrb[0].mxu0
    %v1003 = vadd.f32 0.0, %v1002
    %v1004 = vpop.f32.mrb[0].mxu0
    %v1005 = vadd.f32 0.0, %v1004
    %v1006 = vpop.f32.mrb[0].mxu0
    %v1007 = vpop.f32.mrb[0].mxu0
    %1008 = vdwg.mxu0
    %v1009 = vadd.f32 %v922, %v962
    %v1010 = vadd.f32 %v923, %v964
    %v1011 = vadd.f32 %v924, %v1003
    %v1012 = vadd.f32 %v925, %v1005
    %v1013 = vmul.f32 %v1009, 0.5
    %v1014 = vtanh.pop %v1013
    %v1015 = vmul.f32 %v1014, 0.5
    %v1016 = vadd.f32 %v1015, 0.5
    %v1017 = vmul.f32 %v1010, 0.5
    %v1018 = vtanh.pop %v1017
    %v1019 = vmul.f32 %v1018, 0.5
    %v1020 = vadd.f32 %v1019, 0.5
    %v1021 = vtanh.pop %v1011
    %v1022 = vmul.f32 %v1012, 0.5
    %v1023 = vtanh.pop %v1022
    %v1024 = vmul.f32 %v1023, 0.5
    %v1025 = vadd.f32 %v1024, 0.5
    %v1026 = vmul.f32 %v1020, %v916
    %v1027 = vmul.f32 %v1016, %v1021
    %v1028 = vadd.f32 %v1026, %v1027
    %v1029 = vtanh.pop %v1028
    %v1030 = vmul.f32 %v1025, %v1029
    %s1031 = smul.u32 3, 4
    %s1032 = smul.addr %s1031, 8
    %s1033 = scalar_lea.vmem [#allocation2], %s1032
    %v1034 = vld [vmem:[%s1033] sm:$0xff]
    %v1035 = vld [vmem:[%s1033 + $0x8] sm:$0xff]
    %v1036 = vld [vmem:[%s1033 + $0x10] sm:$0xff]
    %v1037 = vld [vmem:[%s1033 + $0x18] sm:$0xff]
    %v1038 = vpack.c.bf16 %v1030, %v1030
    %1039 = vmatprep.subr.bf16.mxu0 %v640
    %1040 = vmatpush1.bf16.msra.mxu0 %v639
    %1041 = vmatprep.subr.bf16.mxu0 %v644
    %1042 = vmatpush1.bf16.msra.mxu0 %v643
    %1043 = vmatprep.subr.bf16.mxu0 %v648
    %1044 = vmatpush1.bf16.msra.mxu0 %v647
    %1045 = vmatprep.subr.bf16.mxu0 %v652
    %1046 = vmatpush1.bf16.msra.mxu0 %v651
    %1047 = vmatprep.subr.bf16.mxu0 %v656
    %1048 = vmatpush1.bf16.msra.mxu0 %v655
    %1049 = vmatprep.subr.bf16.mxu0 %v660
    %1050 = vmatpush1.bf16.msra.mxu0 %v659
    %1051 = vmatprep.subr.bf16.mxu0 %v664
    %1052 = vmatpush1.bf16.msra.mxu0 %v663
    %1053 = vmatprep.subr.bf16.mxu0 %v668
    %1054 = vmatpush1.bf16.msra.mxu0 %v667
    %1055 = vmatprep.subr.bf16.mxu0 0
    %1056 = vmatpush1.bf16.msra.mxu0 0
    %1057 = vmatprep.subr.bf16.mxu0 0
    %1058 = vmatpush1.bf16.msra.mxu0 0
    %1059 = vmatprep.subr.bf16.mxu0 0
    %1060 = vmatpush1.bf16.msra.mxu0 0
    %1061 = vmatprep.subr.bf16.mxu0 0
    %1062 = vmatpush1.bf16.msra.mxu0 0
    %1063 = vmatprep.subr.bf16.mxu0 0
    %1064 = vmatpush1.bf16.msra.mxu0 0
    %1065 = vmatprep.subr.bf16.mxu0 0
    %1066 = vmatpush1.bf16.msra.mxu0 0
    %1067 = vmatprep.subr.bf16.mxu0 0
    %1068 = vmatpush1.bf16.msra.mxu0 0
    %1069 = vmatprep.subr.bf16.mxu0 0
    %1070 = vmatpush1.bf16.msra.mxu0 0
    %1071 = vmatprep.mubr.bf16.mxu0 0
    %1072 = vmatmul.mubr.bf16.gmra.mrb[0].mxu0 %v1038
    %v1073 = vpop.f32.mrb[0].mxu0
    %v1074 = vadd.f32 0.0, %v1073
    %v1075 = vpop.f32.mrb[0].mxu0
    %v1076 = vadd.f32 0.0, %v1075
    %v1077 = vpop.f32.mrb[0].mxu0
    %v1078 = vpop.f32.mrb[0].mxu0
    %1079 = vdwg.mxu0
    %1080 = vmatprep.subr.bf16.mxu0 %v642
    %1081 = vmatpush1.bf16.msra.mxu0 %v641
    %1082 = vmatprep.subr.bf16.mxu0 %v646
    %1083 = vmatpush1.bf16.msra.mxu0 %v645
    %1084 = vmatprep.subr.bf16.mxu0 %v650
    %1085 = vmatpush1.bf16.msra.mxu0 %v649
    %1086 = vmatprep.subr.bf16.mxu0 %v654
    %1087 = vmatpush1.bf16.msra.mxu0 %v653
    %1088 = vmatprep.subr.bf16.mxu0 %v658
    %1089 = vmatpush1.bf16.msra.mxu0 %v657
    %1090 = vmatprep.subr.bf16.mxu0 %v662
    %1091 = vmatpush1.bf16.msra.mxu0 %v661
    %1092 = vmatprep.subr.bf16.mxu0 %v666
    %1093 = vmatpush1.bf16.msra.mxu0 %v665
    %1094 = vmatprep.subr.bf16.mxu0 %v670
    %1095 = vmatpush1.bf16.msra.mxu0 %v669
    %1096 = vmatprep.subr.bf16.mxu0 0
    %1097 = vmatpush1.bf16.msra.mxu0 0
    %1098 = vmatprep.subr.bf16.mxu0 0
    %1099 = vmatpush1.bf16.msra.mxu0 0
    %1100 = vmatprep.subr.bf16.mxu0 0
    %1101 = vmatpush1.bf16.msra.mxu0 0
    %1102 = vmatprep.subr.bf16.mxu0 0
    %1103 = vmatpush1.bf16.msra.mxu0 0
    %1104 = vmatprep.subr.bf16.mxu0 0
    %1105 = vmatpush1.bf16.msra.mxu0 0
    %1106 = vmatprep.subr.bf16.mxu0 0
    %1107 = vmatpush1.bf16.msra.mxu0 0
    %1108 = vmatprep.subr.bf16.mxu0 0
    %1109 = vmatpush1.bf16.msra.mxu0 0
    %1110 = vmatprep.subr.bf16.mxu0 0
    %1111 = vmatpush1.bf16.msra.mxu0 0
    %1112 = vmatprep.mubr.bf16.mxu0 0
    %1113 = vmatmul.mubr.bf16.gmra.mrb[0].mxu0 %v1038
    %v1114 = vpop.f32.mrb[0].mxu0
    %v1115 = vadd.f32 0.0, %v1114
    %v1116 = vpop.f32.mrb[0].mxu0
    %v1117 = vadd.f32 0.0, %v1116
    %v1118 = vpop.f32.mrb[0].mxu0
    %v1119 = vpop.f32.mrb[0].mxu0
    %1120 = vdwg.mxu0
    %v1121 = vadd.f32 %v1034, %v1074
    %v1122 = vadd.f32 %v1035, %v1076
    %v1123 = vadd.f32 %v1036, %v1115
    %v1124 = vadd.f32 %v1037, %v1117
    %v1125 = vmul.f32 %v1121, 0.5
    %v1126 = vtanh.pop %v1125
    %v1127 = vmul.f32 %v1126, 0.5
    %v1128 = vadd.f32 %v1127, 0.5
    %v1129 = vmul.f32 %v1122, 0.5
    %v1130 = vtanh.pop %v1129
    %v1131 = vmul.f32 %v1130, 0.5
    %v1132 = vadd.f32 %v1131, 0.5
    %v1133 = vtanh.pop %v1123
    %v1134 = vmul.f32 %v1124, 0.5
    %v1135 = vtanh.pop %v1134
    %v1136 = vmul.f32 %v1135, 0.5
    %v1137 = vadd.f32 %v1136, 0.5
    %v1138 = vmul.f32 %v1132, %v1028
    %v1139 = vmul.f32 %v1128, %v1133
    %v1140 = vadd.f32 %v1138, %v1139
    %v1141 = vtanh.pop %v1140
    %v1142 = vmul.f32 %v1137, %v1141
    %s1143 = smul.u32 4, 4
    %s1144 = smul.addr %s1143, 8
    %s1145 = scalar_lea.vmem [#allocation2], %s1144
    %v1146 = vld [vmem:[%s1145] sm:$0xff]
    %v1147 = vld [vmem:[%s1145 + $0x8] sm:$0xff]
    %v1148 = vld [vmem:[%s1145 + $0x10] sm:$0xff]
    %v1149 = vld [vmem:[%s1145 + $0x18] sm:$0xff]
    %v1150 = vpack.c.bf16 %v1142, %v1142
    %1151 = vmatprep.subr.bf16.mxu0 %v640
    %1152 = vmatpush1.bf16.msra.mxu0 %v639
    %1153 = vmatprep.subr.bf16.mxu0 %v644
    %1154 = vmatpush1.bf16.msra.mxu0 %v643
    %1155 = vmatprep.subr.bf16.mxu0 %v648
    %1156 = vmatpush1.bf16.msra.mxu0 %v647
    %1157 = vmatprep.subr.bf16.mxu0 %v652
    %1158 = vmatpush1.bf16.msra.mxu0 %v651
    %1159 = vmatprep.subr.bf16.mxu0 %v656
    %1160 = vmatpush1.bf16.msra.mxu0 %v655
    %1161 = vmatprep.subr.bf16.mxu0 %v660
    %1162 = vmatpush1.bf16.msra.mxu0 %v659
    %1163 = vmatprep.subr.bf16.mxu0 %v664
    %1164 = vmatpush1.bf16.msra.mxu0 %v663
    %1165 = vmatprep.subr.bf16.mxu0 %v668
    %1166 = vmatpush1.bf16.msra.mxu0 %v667
    %1167 = vmatprep.subr.bf16.mxu0 0
    %1168 = vmatpush1.bf16.msra.mxu0 0
    %1169 = vmatprep.subr.bf16.mxu0 0
    %1170 = vmatpush1.bf16.msra.mxu0 0
    %1171 = vmatprep.subr.bf16.mxu0 0
    %1172 = vmatpush1.bf16.msra.mxu0 0
    %1173 = vmatprep.subr.bf16.mxu0 0
    %1174 = vmatpush1.bf16.msra.mxu0 0
    %1175 = vmatprep.subr.bf16.mxu0 0
    %1176 = vmatpush1.bf16.msra.mxu0 0
    %1177 = vmatprep.subr.bf16.mxu0 0
    %1178 = vmatpush1.bf16.msra.mxu0 0
    %1179 = vmatprep.subr.bf16.mxu0 0
    %1180 = vmatpush1.bf16.msra.mxu0 0
    %1181 = vmatprep.subr.bf16.mxu0 0
    %1182 = vmatpush1.bf16.msra.mxu0 0
    %1183 = vmatprep.mubr.bf16.mxu0 0
    %1184 = vmatmul.mubr.bf16.gmra.mrb[0].mxu0 %v1150
    %v1185 = vpop.f32.mrb[0].mxu0
    %v1186 = vadd.f32 0.0, %v1185
    %v1187 = vpop.f32.mrb[0].mxu0
    %v1188 = vadd.f32 0.0, %v1187
    %v1189 = vpop.f32.mrb[0].mxu0
    %v1190 = vpop.f32.mrb[0].mxu0
    %1191 = vdwg.mxu0
    %1192 = vmatprep.subr.bf16.mxu0 %v642
    %1193 = vmatpush1.bf16.msra.mxu0 %v641
    %1194 = vmatprep.subr.bf16.mxu0 %v646
    %1195 = vmatpush1.bf16.msra.mxu0 %v645
    %1196 = vmatprep.subr.bf16.mxu0 %v650
    %1197 = vmatpush1.bf16.msra.mxu0 %v649
    %1198 = vmatprep.subr.bf16.mxu0 %v654
    %1199 = vmatpush1.bf16.msra.mxu0 %v653
    %1200 = vmatprep.subr.bf16.mxu0 %v658
    %1201 = vmatpush1.bf16.msra.mxu0 %v657
    %1202 = vmatprep.subr.bf16.mxu0 %v662
    %1203 = vmatpush1.bf16.msra.mxu0 %v661
    %1204 = vmatprep.subr.bf16.mxu0 %v666
    %1205 = vmatpush1.bf16.msra.mxu0 %v665
    %1206 = vmatprep.subr.bf16.mxu0 %v670
    %1207 = vmatpush1.bf16.msra.mxu0 %v669
    %1208 = vmatprep.subr.bf16.mxu0 0
    %1209 = vmatpush1.bf16.msra.mxu0 0
    %1210 = vmatprep.subr.bf16.mxu0 0
    %1211 = vmatpush1.bf16.msra.mxu0 0
    %1212 = vmatprep.subr.bf16.mxu0 0
    %1213 = vmatpush1.bf16.msra.mxu0 0
    %1214 = vmatprep.subr.bf16.mxu0 0
    %1215 = vmatpush1.bf16.msra.mxu0 0
    %1216 = vmatprep.subr.bf16.mxu0 0
    %1217 = vmatpush1.bf16.msra.mxu0 0
    %1218 = vmatprep.subr.bf16.mxu0 0
    %1219 = vmatpush1.bf16.msra.mxu0 0
    %1220 = vmatprep.subr.bf16.mxu0 0
    %1221 = vmatpush1.bf16.msra.mxu0 0
    %1222 = vmatprep.subr.bf16.mxu0 0
    %1223 = vmatpush1.bf16.msra.mxu0 0
    %1224 = vmatprep.mubr.bf16.mxu0 0
    %1225 = vmatmul.mubr.bf16.gmra.mrb[0].mxu0 %v1150
    %v1226 = vpop.f32.mrb[0].mxu0
    %v1227 = vadd.f32 0.0, %v1226
    %v1228 = vpop.f32.mrb[0].mxu0
    %v1229 = vadd.f32 0.0, %v1228
    %v1230 = vpop.f32.mrb[0].mxu0
    %v1231 = vpop.f32.mrb[0].mxu0
    %1232 = vdwg.mxu0
    %v1233 = vadd.f32 %v1146, %v1186
    %v1234 = vadd.f32 %v1147, %v1188
    %v1235 = vadd.f32 %v1148, %v1227
    %v1236 = vadd.f32 %v1149, %v1229
    %v1237 = vmul.f32 %v1233, 0.5
    %v1238 = vtanh.pop %v1237
    %v1239 = vmul.f32 %v1238, 0.5
    %v1240 = vadd.f32 %v1239, 0.5
    %v1241 = vmul.f32 %v1234, 0.5
    %v1242 = vtanh.pop %v1241
    %v1243 = vmul.f32 %v1242, 0.5
    %v1244 = vadd.f32 %v1243, 0.5
    %v1245 = vtanh.pop %v1235
    %v1246 = vmul.f32 %v1236, 0.5
    %v1247 = vtanh.pop %v1246
    %v1248 = vmul.f32 %v1247, 0.5
    %v1249 = vadd.f32 %v1248, 0.5
    %v1250 = vmul.f32 %v1244, %v1140
    %v1251 = vmul.f32 %v1240, %v1245
    %v1252 = vadd.f32 %v1250, %v1251
    %v1253 = vtanh.pop %v1252
    %v1254 = vmul.f32 %v1249, %v1253
    %s1255 = smul.u32 5, 4
    %s1256 = smul.addr %s1255, 8
    %s1257 = scalar_lea.vmem [#allocation2], %s1256
    %v1258 = vld [vmem:[%s1257] sm:$0xff]
    %v1259 = vld [vmem:[%s1257 + $0x8] sm:$0xff]
    %v1260 = vld [vmem:[%s1257 + $0x10] sm:$0xff]
    %v1261 = vld [vmem:[%s1257 + $0x18] sm:$0xff]
    %v1262 = vpack.c.bf16 %v1254, %v1254
    %1263 = vmatprep.subr.bf16.mxu0 %v640
    %1264 = vmatpush1.bf16.msra.mxu0 %v639
    %1265 = vmatprep.subr.bf16.mxu0 %v644
    %1266 = vmatpush1.bf16.msra.mxu0 %v643
    %1267 = vmatprep.subr.bf16.mxu0 %v648
    %1268 = vmatpush1.bf16.msra.mxu0 %v647
    %1269 = vmatprep.subr.bf16.mxu0 %v652
    %1270 = vmatpush1.bf16.msra.mxu0 %v651
    %1271 = vmatprep.subr.bf16.mxu0 %v656
    %1272 = vmatpush1.bf16.msra.mxu0 %v655
    %1273 = vmatprep.subr.bf16.mxu0 %v660
    %1274 = vmatpush1.bf16.msra.mxu0 %v659
    %1275 = vmatprep.subr.bf16.mxu0 %v664
    %1276 = vmatpush1.bf16.msra.mxu0 %v663
    %1277 = vmatprep.subr.bf16.mxu0 %v668
    %1278 = vmatpush1.bf16.msra.mxu0 %v667
    %1279 = vmatprep.subr.bf16.mxu0 0
    %1280 = vmatpush1.bf16.msra.mxu0 0
    %1281 = vmatprep.subr.bf16.mxu0 0
    %1282 = vmatpush1.bf16.msra.mxu0 0
    %1283 = vmatprep.subr.bf16.mxu0 0
    %1284 = vmatpush1.bf16.msra.mxu0 0
    %1285 = vmatprep.subr.bf16.mxu0 0
    %1286 = vmatpush1.bf16.msra.mxu0 0
    %1287 = vmatprep.subr.bf16.mxu0 0
    %1288 = vmatpush1.bf16.msra.mxu0 0
    %1289 = vmatprep.subr.bf16.mxu0 0
    %1290 = vmatpush1.bf16.msra.mxu0 0
    %1291 = vmatprep.subr.bf16.mxu0 0
    %1292 = vmatpush1.bf16.msra.mxu0 0
    %1293 = vmatprep.subr.bf16.mxu0 0
    %1294 = vmatpush1.bf16.msra.mxu0 0
    %1295 = vmatprep.mubr.bf16.mxu0 0
    %1296 = vmatmul.mubr.bf16.gmra.mrb[0].mxu0 %v1262
    %v1297 = vpop.f32.mrb[0].mxu0
    %v1298 = vadd.f32 0.0, %v1297
    %v1299 = vpop.f32.mrb[0].mxu0
    %v1300 = vadd.f32 0.0, %v1299
    %v1301 = vpop.f32.mrb[0].mxu0
    %v1302 = vpop.f32.mrb[0].mxu0
    %1303 = vdwg.mxu0
    %1304 = vmatprep.subr.bf16.mxu0 %v642
    %1305 = vmatpush1.bf16.msra.mxu0 %v641
    %1306 = vmatprep.subr.bf16.mxu0 %v646
    %1307 = vmatpush1.bf16.msra.mxu0 %v645
    %1308 = vmatprep.subr.bf16.mxu0 %v650
    %1309 = vmatpush1.bf16.msra.mxu0 %v649
    %1310 = vmatprep.subr.bf16.mxu0 %v654
    %1311 = vmatpush1.bf16.msra.mxu0 %v653
    %1312 = vmatprep.subr.bf16.mxu0 %v658
    %1313 = vmatpush1.bf16.msra.mxu0 %v657
    %1314 = vmatprep.subr.bf16.mxu0 %v662
    %1315 = vmatpush1.bf16.msra.mxu0 %v661
    %1316 = vmatprep.subr.bf16.mxu0 %v666
    %1317 = vmatpush1.bf16.msra.mxu0 %v665
    %1318 = vmatprep.subr.bf16.mxu0 %v670
    %1319 = vmatpush1.bf16.msra.mxu0 %v669
    %1320 = vmatprep.subr.bf16.mxu0 0
    %1321 = vmatpush1.bf16.msra.mxu0 0
    %1322 = vmatprep.subr.bf16.mxu0 0
    %1323 = vmatpush1.bf16.msra.mxu0 0
    %1324 = vmatprep.subr.bf16.mxu0 0
    %1325 = vmatpush1.bf16.msra.mxu0 0
    %1326 = vmatprep.subr.bf16.mxu0 0
    %1327 = vmatpush1.bf16.msra.mxu0 0
    %1328 = vmatprep.subr.bf16.mxu0 0
    %1329 = vmatpush1.bf16.msra.mxu0 0
    %1330 = vmatprep.subr.bf16.mxu0 0
    %1331 = vmatpush1.bf16.msra.mxu0 0
    %1332 = vmatprep.subr.bf16.mxu0 0
    %1333 = vmatpush1.bf16.msra.mxu0 0
    %1334 = vmatprep.subr.bf16.mxu0 0
    %1335 = vmatpush1.bf16.msra.mxu0 0
    %1336 = vmatprep.mubr.bf16.mxu0 0
    %1337 = vmatmul.mubr.bf16.gmra.mrb[0].mxu0 %v1262
    %v1338 = vpop.f32.mrb[0].mxu0
    %v1339 = vadd.f32 0.0, %v1338
    %v1340 = vpop.f32.mrb[0].mxu0
    %v1341 = vadd.f32 0.0, %v1340
    %v1342 = vpop.f32.mrb[0].mxu0
    %v1343 = vpop.f32.mrb[0].mxu0
    %1344 = vdwg.mxu0
    %v1345 = vadd.f32 %v1258, %v1298
    %v1346 = vadd.f32 %v1259, %v1300
    %v1347 = vadd.f32 %v1260, %v1339
    %v1348 = vadd.f32 %v1261, %v1341
    %v1349 = vmul.f32 %v1345, 0.5
    %v1350 = vtanh.pop %v1349
    %v1351 = vmul.f32 %v1350, 0.5
    %v1352 = vadd.f32 %v1351, 0.5
    %v1353 = vmul.f32 %v1346, 0.5
    %v1354 = vtanh.pop %v1353
    %v1355 = vmul.f32 %v1354, 0.5
    %v1356 = vadd.f32 %v1355, 0.5
    %v1357 = vtanh.pop %v1347
    %v1358 = vmul.f32 %v1348, 0.5
    %v1359 = vtanh.pop %v1358
    %v1360 = vmul.f32 %v1359, 0.5
    %v1361 = vadd.f32 %v1360, 0.5
    %v1362 = vmul.f32 %v1356, %v1252
    %v1363 = vmul.f32 %v1352, %v1357
    %v1364 = vadd.f32 %v1362, %v1363
    %v1365 = vtanh.pop %v1364
    %v1366 = vmul.f32 %v1361, %v1365
    %s1367 = smul.u32 6, 4
    %s1368 = smul.addr %s1367, 8
    %s1369 = scalar_lea.vmem [#allocation2], %s1368
    %v1370 = vld [vmem:[%s1369] sm:$0xff]
    %v1371 = vld [vmem:[%s1369 + $0x8] sm:$0xff]
    %v1372 = vld [vmem:[%s1369 + $0x10] sm:$0xff]
    %v1373 = vld [vmem:[%s1369 + $0x18] sm:$0xff]
    %v1374 = vpack.c.bf16 %v1366, %v1366
    %1375 = vmatprep.subr.bf16.mxu0 %v640
    %1376 = vmatpush1.bf16.msra.mxu0 %v639
    %1377 = vmatprep.subr.bf16.mxu0 %v644
    %1378 = vmatpush1.bf16.msra.mxu0 %v643
    %1379 = vmatprep.subr.bf16.mxu0 %v648
    %1380 = vmatpush1.bf16.msra.mxu0 %v647
    %1381 = vmatprep.subr.bf16.mxu0 %v652
    %1382 = vmatpush1.bf16.msra.mxu0 %v651
    %1383 = vmatprep.subr.bf16.mxu0 %v656
    %1384 = vmatpush1.bf16.msra.mxu0 %v655
    %1385 = vmatprep.subr.bf16.mxu0 %v660
    %1386 = vmatpush1.bf16.msra.mxu0 %v659
    %1387 = vmatprep.subr.bf16.mxu0 %v664
    %1388 = vmatpush1.bf16.msra.mxu0 %v663
    %1389 = vmatprep.subr.bf16.mxu0 %v668
    %1390 = vmatpush1.bf16.msra.mxu0 %v667
    %1391 = vmatprep.subr.bf16.mxu0 0
    %1392 = vmatpush1.bf16.msra.mxu0 0
    %1393 = vmatprep.subr.bf16.mxu0 0
    %1394 = vmatpush1.bf16.msra.mxu0 0
    %1395 = vmatprep.subr.bf16.mxu0 0
    %1396 = vmatpush1.bf16.msra.mxu0 0
    %1397 = vmatprep.subr.bf16.mxu0 0
    %1398 = vmatpush1.bf16.msra.mxu0 0
    %1399 = vmatprep.subr.bf16.mxu0 0
    %1400 = vmatpush1.bf16.msra.mxu0 0
    %1401 = vmatprep.subr.bf16.mxu0 0
    %1402 = vmatpush1.bf16.msra.mxu0 0
    %1403 = vmatprep.subr.bf16.mxu0 0
    %1404 = vmatpush1.bf16.msra.mxu0 0
    %1405 = vmatprep.subr.bf16.mxu0 0
    %1406 = vmatpush1.bf16.msra.mxu0 0
    %1407 = vmatprep.mubr.bf16.mxu0 0
    %1408 = vmatmul.mubr.bf16.gmra.mrb[0].mxu0 %v1374
    %v1409 = vpop.f32.mrb[0].mxu0
    %v1410 = vadd.f32 0.0, %v1409
    %v1411 = vpop.f32.mrb[0].mxu0
    %v1412 = vadd.f32 0.0, %v1411
    %v1413 = vpop.f32.mrb[0].mxu0
    %v1414 = vpop.f32.mrb[0].mxu0
    %1415 = vdwg.mxu0
    %1416 = vmatprep.subr.bf16.mxu0 %v642
    %1417 = vmatpush1.bf16.msra.mxu0 %v641
    %1418 = vmatprep.subr.bf16.mxu0 %v646
    %1419 = vmatpush1.bf16.msra.mxu0 %v645
    %1420 = vmatprep.subr.bf16.mxu0 %v650
    %1421 = vmatpush1.bf16.msra.mxu0 %v649
    %1422 = vmatprep.subr.bf16.mxu0 %v654
    %1423 = vmatpush1.bf16.msra.mxu0 %v653
    %1424 = vmatprep.subr.bf16.mxu0 %v658
    %1425 = vmatpush1.bf16.msra.mxu0 %v657
    %1426 = vmatprep.subr.bf16.mxu0 %v662
    %1427 = vmatpush1.bf16.msra.mxu0 %v661
    %1428 = vmatprep.subr.bf16.mxu0 %v666
    %1429 = vmatpush1.bf16.msra.mxu0 %v665
    %1430 = vmatprep.subr.bf16.mxu0 %v670
    %1431 = vmatpush1.bf16.msra.mxu0 %v669
    %1432 = vmatprep.subr.bf16.mxu0 0
    %1433 = vmatpush1.bf16.msra.mxu0 0
    %1434 = vmatprep.subr.bf16.mxu0 0
    %1435 = vmatpush1.bf16.msra.mxu0 0
    %1436 = vmatprep.subr.bf16.mxu0 0
    %1437 = vmatpush1.bf16.msra.mxu0 0
    %1438 = vmatprep.subr.bf16.mxu0 0
    %1439 = vmatpush1.bf16.msra.mxu0 0
    %1440 = vmatprep.subr.bf16.mxu0 0
    %1441 = vmatpush1.bf16.msra.mxu0 0
    %1442 = vmatprep.subr.bf16.mxu0 0
    %1443 = vmatpush1.bf16.msra.mxu0 0
    %1444 = vmatprep.subr.bf16.mxu0 0
    %1445 = vmatpush1.bf16.msra.mxu0 0
    %1446 = vmatprep.subr.bf16.mxu0 0
    %1447 = vmatpush1.bf16.msra.mxu0 0
    %1448 = vmatprep.mubr.bf16.mxu0 0
    %1449 = vmatmul.mubr.bf16.gmra.mrb[0].mxu0 %v1374
    %v1450 = vpop.f32.mrb[0].mxu0
    %v1451 = vadd.f32 0.0, %v1450
    %v1452 = vpop.f32.mrb[0].mxu0
    %v1453 = vadd.f32 0.0, %v1452
    %v1454 = vpop.f32.mrb[0].mxu0
    %v1455 = vpop.f32.mrb[0].mxu0
    %1456 = vdwg.mxu0
    %v1457 = vadd.f32 %v1370, %v1410
    %v1458 = vadd.f32 %v1371, %v1412
    %v1459 = vadd.f32 %v1372, %v1451
    %v1460 = vadd.f32 %v1373, %v1453
    %v1461 = vmul.f32 %v1457, 0.5
    %v1462 = vtanh.pop %v1461
    %v1463 = vmul.f32 %v1462, 0.5
    %v1464 = vadd.f32 %v1463, 0.5
    %v1465 = vmul.f32 %v1458, 0.5
    %v1466 = vtanh.pop %v1465
    %v1467 = vmul.f32 %v1466, 0.5
    %v1468 = vadd.f32 %v1467, 0.5
    %v1469 = vtanh.pop %v1459
    %v1470 = vmul.f32 %v1460, 0.5
    %v1471 = vtanh.pop %v1470
    %v1472 = vmul.f32 %v1471, 0.5
    %v1473 = vadd.f32 %v1472, 0.5
    %v1474 = vmul.f32 %v1468, %v1364
    %v1475 = vmul.f32 %v1464, %v1469
    %v1476 = vadd.f32 %v1474, %v1475
    %v1477 = vtanh.pop %v1476
    %v1478 = vmul.f32 %v1473, %v1477
    %s1479 = smul.u32 7, 4
    %s1480 = smul.addr %s1479, 8
    %s1481 = scalar_lea.vmem [#allocation2], %s1480
    %v1482 = vld [vmem:[%s1481] sm:$0xff]
    %v1483 = vld [vmem:[%s1481 + $0x8] sm:$0xff]
    %v1484 = vld [vmem:[%s1481 + $0x10] sm:$0xff]
    %v1485 = vld [vmem:[%s1481 + $0x18] sm:$0xff]
    %v1486 = vpack.c.bf16 %v1478, %v1478
    %1487 = vmatprep.subr.bf16.mxu0 %v640
    %1488 = vmatpush1.bf16.msra.mxu0 %v639
    %1489 = vmatprep.subr.bf16.mxu0 %v644
    %1490 = vmatpush1.bf16.msra.mxu0 %v643
    %1491 = vmatprep.subr.bf16.mxu0 %v648
    %1492 = vmatpush1.bf16.msra.mxu0 %v647
    %1493 = vmatprep.subr.bf16.mxu0 %v652
    %1494 = vmatpush1.bf16.msra.mxu0 %v651
    %1495 = vmatprep.subr.bf16.mxu0 %v656
    %1496 = vmatpush1.bf16.msra.mxu0 %v655
    %1497 = vmatprep.subr.bf16.mxu0 %v660
    %1498 = vmatpush1.bf16.msra.mxu0 %v659
    %1499 = vmatprep.subr.bf16.mxu0 %v664
    %1500 = vmatpush1.bf16.msra.mxu0 %v663
    %1501 = vmatprep.subr.bf16.mxu0 %v668
    %1502 = vmatpush1.bf16.msra.mxu0 %v667
    %1503 = vmatprep.subr.bf16.mxu0 0
    %1504 = vmatpush1.bf16.msra.mxu0 0
    %1505 = vmatprep.subr.bf16.mxu0 0
    %1506 = vmatpush1.bf16.msra.mxu0 0
    %1507 = vmatprep.subr.bf16.mxu0 0
    %1508 = vmatpush1.bf16.msra.mxu0 0
    %1509 = vmatprep.subr.bf16.mxu0 0
    %1510 = vmatpush1.bf16.msra.mxu0 0
    %1511 = vmatprep.subr.bf16.mxu0 0
    %1512 = vmatpush1.bf16.msra.mxu0 0
    %1513 = vmatprep.subr.bf16.mxu0 0
    %1514 = vmatpush1.bf16.msra.mxu0 0
    %1515 = vmatprep.subr.bf16.mxu0 0
    %1516 = vmatpush1.bf16.msra.mxu0 0
    %1517 = vmatprep.subr.bf16.mxu0 0
    %1518 = vmatpush1.bf16.msra.mxu0 0
    %1519 = vmatprep.mubr.bf16.mxu0 0
    %1520 = vmatmul.mubr.bf16.gmra.mrb[0].mxu0 %v1486
    %v1521 = vpop.f32.mrb[0].mxu0
    %v1522 = vadd.f32 0.0, %v1521
    %v1523 = vpop.f32.mrb[0].mxu0
    %v1524 = vadd.f32 0.0, %v1523
    %v1525 = vpop.f32.mrb[0].mxu0
    %v1526 = vpop.f32.mrb[0].mxu0
    %1527 = vdwg.mxu0
    %1528 = vmatprep.subr.bf16.mxu0 %v642
    %1529 = vmatpush1.bf16.msra.mxu0 %v641
    %1530 = vmatprep.subr.bf16.mxu0 %v646
    %1531 = vmatpush1.bf16.msra.mxu0 %v645
    %1532 = vmatprep.subr.bf16.mxu0 %v650
    %1533 = vmatpush1.bf16.msra.mxu0 %v649
    %1534 = vmatprep.subr.bf16.mxu0 %v654
    %1535 = vmatpush1.bf16.msra.mxu0 %v653
    %1536 = vmatprep.subr.bf16.mxu0 %v658
    %1537 = vmatpush1.bf16.msra.mxu0 %v657
    %1538 = vmatprep.subr.bf16.mxu0 %v662
    %1539 = vmatpush1.bf16.msra.mxu0 %v661
    %1540 = vmatprep.subr.bf16.mxu0 %v666
    %1541 = vmatpush1.bf16.msra.mxu0 %v665
    %1542 = vmatprep.subr.bf16.mxu0 %v670
    %1543 = vmatpush1.bf16.msra.mxu0 %v669
    %1544 = vmatprep.subr.bf16.mxu0 0
    %1545 = vmatpush1.bf16.msra.mxu0 0
    %1546 = vmatprep.subr.bf16.mxu0 0
    %1547 = vmatpush1.bf16.msra.mxu0 0
    %1548 = vmatprep.subr.bf16.mxu0 0
    %1549 = vmatpush1.bf16.msra.mxu0 0
    %1550 = vmatprep.subr.bf16.mxu0 0
    %1551 = vmatpush1.bf16.msra.mxu0 0
    %1552 = vmatprep.subr.bf16.mxu0 0
    %1553 = vmatpush1.bf16.msra.mxu0 0
    %1554 = vmatprep.subr.bf16.mxu0 0
    %1555 = vmatpush1.bf16.msra.mxu0 0
    %1556 = vmatprep.subr.bf16.mxu0 0
    %1557 = vmatpush1.bf16.msra.mxu0 0
    %1558 = vmatprep.subr.bf16.mxu0 0
    %1559 = vmatpush1.bf16.msra.mxu0 0
    %1560 = vmatprep.mubr.bf16.mxu0 0
    %1561 = vmatmul.mubr.bf16.gmra.mrb[0].mxu0 %v1486
    %v1562 = vpop.f32.mrb[0].mxu0
    %v1563 = vadd.f32 0.0, %v1562
    %v1564 = vpop.f32.mrb[0].mxu0
    %v1565 = vadd.f32 0.0, %v1564
    %v1566 = vpop.f32.mrb[0].mxu0
    %v1567 = vpop.f32.mrb[0].mxu0
    %1568 = vdwg.mxu0
    %v1569 = vadd.f32 %v1482, %v1522
    %v1570 = vadd.f32 %v1483, %v1524
    %v1571 = vadd.f32 %v1484, %v1563
    %v1572 = vadd.f32 %v1485, %v1565
    %v1573 = vmul.f32 %v1569, 0.5
    %v1574 = vtanh.pop %v1573
    %v1575 = vmul.f32 %v1574, 0.5
    %v1576 = vadd.f32 %v1575, 0.5
    %v1577 = vmul.f32 %v1570, 0.5
    %v1578 = vtanh.pop %v1577
    %v1579 = vmul.f32 %v1578, 0.5
    %v1580 = vadd.f32 %v1579, 0.5
    %v1581 = vtanh.pop %v1571
    %v1582 = vmul.f32 %v1572, 0.5
    %v1583 = vtanh.pop %v1582
    %v1584 = vmul.f32 %v1583, 0.5
    %v1585 = vadd.f32 %v1584, 0.5
    %v1586 = vmul.f32 %v1580, %v1476
    %v1587 = vmul.f32 %v1576, %v1581
    %v1588 = vadd.f32 %v1586, %v1587
    %v1589 = vtanh.pop %v1588
    %v1590 = vmul.f32 %v1585, %v1589
    %v1591 = vpack.c.bf16 %v1590, %v1590
    %v1592 = vld [vmem:[#allocation9] sm:$0xf]
    %v1593 = vld [vmem:[#allocation9 + $0x4] sm:$0xf]
    %v1594 = vld [vmem:[#allocation9 + $0x8] sm:$0xf]
    %v1595 = vld [vmem:[#allocation9 + $0xc] sm:$0xf]
    %v1596 = vld [vmem:[#allocation9 + $0x10] sm:$0xf]
    %v1597 = vld [vmem:[#allocation9 + $0x14] sm:$0xf]
    %v1598 = vld [vmem:[#allocation9 + $0x18] sm:$0xf]
    %v1599 = vld [vmem:[#allocation9 + $0x1c] sm:$0xf]
    %v1600 = vld [vmem:[#allocation9 + $0x20] sm:$0xf]
    %v1601 = vld [vmem:[#allocation9 + $0x24] sm:$0xf]
    %v1602 = vld [vmem:[#allocation9 + $0x28] sm:$0xf]
    %v1603 = vld [vmem:[#allocation9 + $0x2c] sm:$0xf]
    %v1604 = vld [vmem:[#allocation9 + $0x30] sm:$0xf]
    %v1605 = vld [vmem:[#allocation9 + $0x34] sm:$0xf]
    %v1606 = vld [vmem:[#allocation9 + $0x38] sm:$0xf]
    %v1607 = vld [vmem:[#allocation9 + $0x3c] sm:$0xf]
    %v1608 = vld [vmem:[%s5] sm:$0x1]
    %v1610 = vlaneseq
    %v1611 = vshrl.u32 %v1610, 7
    %v1612 = vsub.s32 0, %v1611
    %v1613 = vrot.slane %v1608, %v1612
    %v1631 = vunpack.c.l.b16 %v1592
    %v1632 = vunpack.c.l.b16 %v1593
    %v1633 = vunpack.c.l.b16 %v1594
    %v1634 = vunpack.c.l.b16 %v1595
    %v1635 = vunpack.c.l.b16 %v1596
    %v1636 = vunpack.c.l.b16 %v1597
    %v1637 = vunpack.c.l.b16 %v1598
    %v1638 = vunpack.c.l.b16 %v1599
    %v1639 = vunpack.c.l.b16 %v1600
    %v1640 = vunpack.c.l.b16 %v1601
    %v1641 = vunpack.c.l.b16 %v1602
    %v1642 = vunpack.c.l.b16 %v1603
    %v1643 = vunpack.c.l.b16 %v1604
    %v1644 = vunpack.c.l.b16 %v1605
    %v1645 = vunpack.c.l.b16 %v1606
    %v1646 = vunpack.c.l.b16 %v1607
    %v1647 = vpack.c.b16 %v1632, %v1631
    %v1648 = vpack.c.b16 %v1634, %v1633
    %v1649 = vpack.c.b16 %v1636, %v1635
    %v1650 = vpack.c.b16 %v1638, %v1637
    %v1651 = vpack.c.b16 %v1640, %v1639
    %v1652 = vpack.c.b16 %v1642, %v1641
    %v1653 = vpack.c.b16 %v1644, %v1643
    %v1654 = vpack.c.b16 %v1646, %v1645
    %1663 = vmatprep.subr.bf16.mxu0 0
    %1664 = vmatpush1.bf16.msra.mxu0 %v1647
    %1665 = vmatprep.subr.bf16.mxu0 0
    %1666 = vmatpush1.bf16.msra.mxu0 %v1648
    %1667 = vmatprep.subr.bf16.mxu0 0
    %1668 = vmatpush1.bf16.msra.mxu0 %v1649
    %1669 = vmatprep.subr.bf16.mxu0 0
    %1670 = vmatpush1.bf16.msra.mxu0 %v1650
    %1671 = vmatprep.subr.bf16.mxu0 0
    %1672 = vmatpush1.bf16.msra.mxu0 %v1651
    %1673 = vmatprep.subr.bf16.mxu0 0
    %1674 = vmatpush1.bf16.msra.mxu0 %v1652
    %1675 = vmatprep.subr.bf16.mxu0 0
    %1676 = vmatpush1.bf16.msra.mxu0 %v1653
    %1677 = vmatprep.subr.bf16.mxu0 0
    %1678 = vmatpush1.bf16.msra.mxu0 %v1654
    %1679 = vmatprep.subr.bf16.mxu0 0
    %1680 = vmatpush1.bf16.msra.mxu0 0
    %1681 = vmatprep.subr.bf16.mxu0 0
    %1682 = vmatpush1.bf16.msra.mxu0 0
    %1683 = vmatprep.subr.bf16.mxu0 0
    %1684 = vmatpush1.bf16.msra.mxu0 0
    %1685 = vmatprep.subr.bf16.mxu0 0
    %1686 = vmatpush1.bf16.msra.mxu0 0
    %1687 = vmatprep.subr.bf16.mxu0 0
    %1688 = vmatpush1.bf16.msra.mxu0 0
    %1689 = vmatprep.subr.bf16.mxu0 0
    %1690 = vmatpush1.bf16.msra.mxu0 0
    %1691 = vmatprep.subr.bf16.mxu0 0
    %1692 = vmatpush1.bf16.msra.mxu0 0
    %1693 = vmatprep.subr.bf16.mxu0 0
    %1694 = vmatpush1.bf16.msra.mxu0 0
    %1695 = vmatprep.mubr.bf16.mxu0 0
    %1696 = vmatmul.mubr.bf16.gmra.mrb[0].mxu0 %v1591
    %v1697 = vpop.f32.mrb[0].mxu0
    %v1698 = vadd.f32 %v1613, %v1697
    %v1699 = vpop.f32.mrb[0].mxu0
    %v1700 = vpop.f32.mrb[0].mxu0
    %v1701 = vpop.f32.mrb[0].mxu0
    %1702 = vdwg.mxu0
    %1703 = vst [vmem:[#allocation11] sm:$0xff] %v1698
    // Predicated region
    $region42: #{tpu_custom_call.1} parent=1 // pred_check
      _
    $region43: #{tpu_custom_call.1} parent=1 // pred_check_branch
      %1705 = sbr.rel (0) target = $region45
    $region44: #{tpu_custom_call.1} parent=1 // pred_region
      %s1707 = ssub.s32 128, 128
      %1708 = vsyncadd [#allocation5], %s1707
      %s1710 = sshll.u32 [#allocation11], 4
      %s1711 = int_to_ptr.vmem [resolvable:$true] %s1710
      %1713 = dma.vmem_to_hbm [thread:$0]  %s1711, 128, %s6, [#allocation5]
    $region45: #{tpu_custom_call.1} parent=1 // pred_fallthru
      _
    // Predicated region
    $region46: #{tpu_custom_call.1} parent=1 // pred_check
      _
    $region47: #{tpu_custom_call.1} parent=1 // pred_check_branch
      %1715 = sbr.rel (0) target = $region49
    $region48: #{tpu_custom_call.1} parent=1 // pred_region
      %1716 = dma.done [#allocation5], 128
    $region49: #{tpu_custom_call.1} parent=1 // pred_fallthru
      _
    %1717 = vsyncpa [#allocation4], 1
    %1718 = vsyncpa [#allocation7], 1
    %1719 = vsyncpa [#allocation10], 1
    %1720 = vsyncpa [#allocation5], 1

</llo_original>
